<compile_context>
chip_gen: v5e
topology: v5e:2x2
jax: 0.10.0
libtpu: 0.0.40
codegen_flags: <defaults>
</compile_context>

<pallas_src>
import math
from functools import partial

import jax
import jax.numpy as jnp
from jax import lax
from jax.experimental import pallas as pl
from jax.experimental.pallas import tpu as pltpu

VMEM_LIMIT_BYTES = 32 * 1024 * 1024   # explicit, safe on v5e/v6e/v7x


def _pick_row_tile(n_rows, max_tile=1024):
    """Largest power-of-two-ish tile (multiple of 8) that divides n_rows."""
    for t in (1024, 512, 256, 128, 64, 32, 16, 8):
        if t <= max_tile and n_rows % t == 0:
            return t
    return n_rows    # fallback: whole extent (full-dim block is always legal)


# ----------------------------------------------------------------------------
# Kernel A: fused backbone 1x1 conv + ReLU + input_proj 1x1 conv, over flattened
# (B*HW) rows.
#   mem = relu(x @ W_bb + b_bb) @ W_proj + b_proj
# The Cin (=4) contraction runs as unrolled VPU FMAs; the Cbb (=128) contraction
# runs on the MXU with f32 accumulation.
# ----------------------------------------------------------------------------
def _backbone_proj_kernel(x_ref, wbb_ref, bbb_ref, wproj_ref, bproj_ref, o_ref):
    # x_ref:    (T, Cin)  bf16
    # wbb_ref:  (Cin, Cbb) bf16     bbb_ref:  (1, Cbb) f32
    # wproj_ref:(Cbb, D)   bf16     bproj_ref:(1, D)   f32
    # o_ref:    (T, D)     bf16
    cin = x_ref.shape[-1]
    x = x_ref[...].astype(jnp.float32)          # (T, Cin)
    wbb = wbb_ref[...].astype(jnp.float32)      # (Cin, Cbb)

    # Cin is tiny (4): VPU broadcast-FMA instead of an MXU matmul with K=4.
    h = bbb_ref[...]                            # (1, Cbb) f32, broadcasts over T
    for c in range(cin):                        # static unroll
        h = h + x[:, c:c + 1] * wbb[c:c + 1, :]
    h = jnp.maximum(h, 0.0).astype(jnp.bfloat16)      # backbone stand-in ReLU

    m = jnp.dot(h, wproj_ref[...], preferred_element_type=jnp.float32) + bproj_ref[...]
    o_ref[...] = m.astype(o_ref.dtype)


def backbone_and_proj(x_rows, w_bb, b_bb, w_proj, b_proj, *, tile_r):
    """x_rows: [R, Cin] bf16 (R = B*HW) -> mem_rows [R, D] bf16."""
    R, Cin = x_rows.shape
    Cbb = w_bb.shape[1]
    D = w_proj.shape[1]
    assert R % tile_r == 0
    return pl.pallas_call(
        _backbone_proj_kernel,
        out_shape=jax.ShapeDtypeStruct((R, D), jnp.bfloat16),
        grid=(pl.cdiv(R, tile_r),),
        in_specs=[
            pl.BlockSpec((tile_r, Cin), lambda r: (r, 0)),
            pl.BlockSpec((Cin, Cbb), lambda r: (0, 0)),
            pl.BlockSpec((1, Cbb), lambda r: (0, 0)),
            pl.BlockSpec((Cbb, D), lambda r: (0, 0)),
            pl.BlockSpec((1, D), lambda r: (0, 0)),
        ],
        out_specs=pl.BlockSpec((tile_r, D), lambda r: (r, 0)),
        compiler_params=pltpu.CompilerParams(
            dimension_semantics=("parallel",),
            vmem_limit_bytes=VMEM_LIMIT_BYTES),
    )(x_rows, w_bb, b_bb, w_proj, b_proj)


# ----------------------------------------------------------------------------
# Kernel B: fused cross-attention decoder step + GroupWiseLinear head.
# Batch-invariant pieces (q = query_embed @ Wq, pe_k = pe @ Wk, Wk|Wv concat)
# are precomputed once in the wrapper and passed in.
#   KV  = mem @ [Wk | Wv]            (one 256-wide MXU matmul)
#   K   = KV[:, :D] + pe_k ;  V = KV[:, D:]
#   hs  = softmax(q K^T / sqrt(D)) V @ Wo
#   out[q] = sum_d W_fc[q, d] * hs[q, d] + b_fc[q]        (lane-dense [1, Q] store)
# ----------------------------------------------------------------------------
def _attn_gwl_kernel(scale, mem_ref, pek_ref, q_ref, wkv_ref, wo_ref,
                     wfc_ref, bfc_ref, o_ref):
    mem = mem_ref[0]                                              # (HW, D) bf16
    D = wo_ref.shape[0]

    kv = jnp.dot(mem, wkv_ref[...], preferred_element_type=jnp.float32)   # (HW, 2D)
    k = kv[:, :D] + pek_ref[...]                                  # f32, pos on keys
    v = kv[:, D:]                                                 # f32

    # scores: contract the last dim of both operands directly — no explicit K
    # transpose / XLU relayout.
    scores = lax.dot_general(
        q_ref[...], k.astype(jnp.bfloat16),
        dimension_numbers=(((1,), (1,)), ((), ())),
        preferred_element_type=jnp.float32) * scale               # (Q, HW)

    scores = scores - jnp.max(scores, axis=-1, keepdims=True)
    p = jnp.exp(scores)                                           # f32
    p = p / jnp.sum(p, axis=-1, keepdims=True)                    # exact softmax

    ctx = jnp.dot(p.astype(jnp.bfloat16), v.astype(jnp.bfloat16),
                  preferred_element_type=jnp.float32)             # (Q, D)
    hs = jnp.dot(ctx.astype(jnp.bfloat16), wo_ref[...],
                 preferred_element_type=jnp.float32)              # (Q, D)

    # GroupWiseLinear epilogue (hs never leaves VMEM); lane-dense (1, Q) store.
    prod = wfc_ref[...] * hs                                      # (Q, D) f32
    o_ref[...] = jnp.sum(prod[None], axis=-1) + bfc_ref[...]      # (1, Q)


def attention_gwl(mem, pe_k, q_proj, wkv, wo, w_fc, b_fc):
    """mem: [B, HW, D] bf16, pe_k: [HW, D] f32, q_proj: [Q, D] bf16,
    wkv: [D, 2D] bf16, wo: [D, D] bf16, w_fc: [Q, D] f32, b_fc: [1, Q] f32
    -> out [B, Q] f32."""
    B, HW, D = mem.shape
    Q = q_proj.shape[0]
    scale = 1.0 / math.sqrt(D)
    # NOTE: batch axis is "parallel" — with B>=2 both v7x TensorCores get work.
    # TODO(synk): for B=1 inference on v7x, add a second parallel axis (split Q
    #             or HW) so the second TensorCore is not idle.
    return pl.pallas_call(
        partial(_attn_gwl_kernel, scale),
        out_shape=jax.ShapeDtypeStruct((B, Q), jnp.float32),
        grid=(B,),
        in_specs=[
            pl.BlockSpec((1, HW, D), lambda b: (b, 0, 0)),
            pl.BlockSpec((HW, D), lambda b: (0, 0)),   # pe @ Wk, VMEM-resident
            pl.BlockSpec((Q, D), lambda b: (0, 0)),    # query_embed @ Wq
            pl.BlockSpec((D, 2 * D), lambda b: (0, 0)),  # [Wk | Wv]
            pl.BlockSpec((D, D), lambda b: (0, 0)),
            pl.BlockSpec((Q, D), lambda b: (0, 0)),
            pl.BlockSpec((1, Q), lambda b: (0, 0)),
        ],
        out_specs=pl.BlockSpec((1, Q), lambda b: (b, 0)),
        compiler_params=pltpu.CompilerParams(
            dimension_semantics=("parallel",),
            vmem_limit_bytes=VMEM_LIMIT_BYTES),
    )(mem, pe_k, q_proj, wkv, wo, w_fc, b_fc)


# ----------------------------------------------------------------------------
# Full forward (glue + batch-invariant hoists in plain JAX, hot paths in Pallas)
# ----------------------------------------------------------------------------
def query2label_forward(x_nchw, params):
    B, Cin, H, W = x_nchw.shape
    HW = H * W
    D = params["w_proj"].shape[1]

    # NCHW -> channels-last flattened rows [B*HW, Cin] (features on the lane axis)
    x_rows = jnp.transpose(x_nchw, (0, 2, 3, 1)).reshape(B * HW, Cin)
    x_rows = x_rows.astype(jnp.bfloat16)

    # Kernel A: fused backbone (1x1 conv + ReLU) + input_proj (1x1 conv)
    tile_r = _pick_row_tile(B * HW)
    mem_rows = backbone_and_proj(x_rows, params["w_bb"], params["b_bb"],
                                 params["w_proj"], params["b_proj"], tile_r=tile_r)
    mem = mem_rows.reshape(B, HW, D)

    # sinusoidal positional embedding [HW, D] — single copy, never broadcast to B
    position = jnp.arange(HW, dtype=jnp.float32)[:, None]
    div_term = jnp.exp(jnp.arange(0, D, 2, dtype=jnp.float32) * (-math.log(10000.0) / D))
    pe = jnp.zeros((HW, D), jnp.float32)
    pe = pe.at[:, 0::2].set(jnp.sin(position * div_term))
    pe = pe.at[:, 1::2].set(jnp.cos(position * div_term))

    # Batch-invariant hoists (done once, outside the per-batch grid):
    #   pe_k = pe @ Wk   (keys get the positional embedding via distributivity)
    #   q    = query_embed @ Wq
    #   wkv  = [Wk | Wv]  -> single 256-wide MXU matmul inside the kernel
    pe_k = jnp.dot(pe.astype(jnp.bfloat16), params["wk"],
                   preferred_element_type=jnp.float32)                      # [HW, D] f32
    q_proj = jnp.dot(params["query_embed"], params["wq"],
                     preferred_element_type=jnp.float32).astype(jnp.bfloat16)  # [Q, D]
    wkv = jnp.concatenate([params["wk"], params["wv"]], axis=1)             # [D, 2D]

    # Kernel B: fused cross-attention "transformer" + GroupWiseLinear head
    out = attention_gwl(mem, pe_k, q_proj, wkv, params["wo"],
                        params["w_fc"], params["b_fc"])                     # [B, num_class]
    return out


# ----------------------------------------------------------------------------
# Deterministic parameter construction (shapes from Query2Label.__init__)
# ----------------------------------------------------------------------------
def make_params(key, c_in, c_bb, hidden_dim, num_class):
    ks = jax.random.split(key, 10)
    u = lambda k, shape, bound: jax.random.uniform(k, shape, jnp.float32, -bound, bound)

    # backbone stand-in conv
    w_bb = u(ks[0], (c_in, c_bb), 1.0 / math.sqrt(c_in)).astype(jnp.bfloat16)
    b_bb = u(ks[1], (1, c_bb), 1.0 / math.sqrt(c_in))
    # input_proj: Conv2d(c_bb, hidden_dim, 1)
    w_proj = u(ks[2], (c_bb, hidden_dim), 1.0 / math.sqrt(c_bb)).astype(jnp.bfloat16)
    b_proj = u(ks[3], (1, hidden_dim), 1.0 / math.sqrt(c_bb))
    # query_embed: nn.Embedding(num_class, hidden_dim) ~ N(0, 1)
    query_embed = jax.random.normal(ks[4], (num_class, hidden_dim),
                                    jnp.float32).astype(jnp.bfloat16)
    # transformer stand-in projections
    bound_d = 1.0 / math.sqrt(hidden_dim)
    wq = u(ks[5], (hidden_dim, hidden_dim), bound_d).astype(jnp.bfloat16)
    wk = u(ks[6], (hidden_dim, hidden_dim), bound_d).astype(jnp.bfloat16)
    wv = u(ks[7], (hidden_dim, hidden_dim), bound_d).astype(jnp.bfloat16)
    wo = u(ks[8], (hidden_dim, hidden_dim), bound_d).astype(jnp.bfloat16)
    # GroupWiseLinear: W [1, num_class, hidden_dim] (stored [Q, D]), b [1, num_class]
    # (stored [1, Q]); kept f32 for the VPU-side multiply-reduce.
    stdv = 1.0 / math.sqrt(hidden_dim)
    kf1, kf2 = jax.random.split(ks[9])
    w_fc = jax.random.uniform(kf1, (num_class, hidden_dim), jnp.float32, -stdv, stdv)
    b_fc = jax.random.uniform(kf2, (1, num_class), jnp.float32, -stdv, stdv)

    return dict(w_bb=w_bb, b_bb=b_bb, w_proj=w_proj, b_proj=b_proj,
                query_embed=query_embed, wq=wq, wk=wk, wv=wv, wo=wo,
                w_fc=w_fc, b_fc=b_fc)


if __name__ == "__main__":
    B, Cin, H, W = 2, 4, 16, 16        # input image-like tensor (NCHW), HW = 256
    C_BB = 128                         # backbone.num_channels (lane-aligned)
    HIDDEN = 128                       # transformer.d_model  (lane-aligned)
    NUM_CLASS = 16                     # num_class            (sublane-aligned)

    key = jax.random.PRNGKey(0)
    kx, kp = jax.random.split(key)
    x = jax.random.normal(kx, (B, Cin, H, W), jnp.float32)
    params = make_params(kp, Cin, C_BB, HIDDEN, NUM_CLASS)

    out = query2label_forward(x, params)
    out = jax.block_until_ready(out)
    assert out.shape == (B, NUM_CLASS), out.shape
    assert bool(jnp.all(jnp.isfinite(out)))
    print("KERNEL_OK")
</pallas_src>

<mosaic_0001>
module attributes {stable_mosaic.version = 11 : i64} {
  func.func @_backbone_proj_kernel(%arg0: i32, %arg1: memref<512x4xbf16, #tpu.memory_space<vmem>>, %arg2: memref<4x128xbf16, #tpu.memory_space<vmem>>, %arg3: memref<1x128xf32, #tpu.memory_space<vmem>>, %arg4: memref<128x128xbf16, #tpu.memory_space<vmem>>, %arg5: memref<1x128xf32, #tpu.memory_space<vmem>>, %arg6: memref<512x128xbf16, #tpu.memory_space<vmem>>) attributes {dimension_semantics = [#tpu.dimension_semantics<parallel>], iteration_bounds = array<i64: 1>, scalar_prefetch = 0 : i64, scratch_operands = 0 : i64, tpu.core_type = #tpu.core_type<tc>, window_params = [{transform_indices = @transform_0, window_bounds = array<i64: 512, 4>}, {pipeline_mode = #tpu.pipeline_mode<synchronous>, transform_indices = @transform_1, window_bounds = array<i64: 4, 128>}, {pipeline_mode = #tpu.pipeline_mode<synchronous>, transform_indices = @transform_2, window_bounds = array<i64: 1, 128>}, {pipeline_mode = #tpu.pipeline_mode<synchronous>, transform_indices = @transform_3, window_bounds = array<i64: 128, 128>}, {pipeline_mode = #tpu.pipeline_mode<synchronous>, transform_indices = @transform_4, window_bounds = array<i64: 1, 128>}, {transform_indices = @transform_5, window_bounds = array<i64: 512, 128>}]} {
    %c0 = arith.constant 0 : index
    %c0_0 = arith.constant 0 : index
    %0 = vector.load %arg1[%c0, %c0_0] : memref<512x4xbf16, #tpu.memory_space<vmem>>, vector<512x4xbf16>
    %1 = arith.extf %0 : vector<512x4xbf16> to vector<512x4xf32>
    %c0_1 = arith.constant 0 : index
    %c0_2 = arith.constant 0 : index
    %2 = vector.load %arg2[%c0_1, %c0_2] : memref<4x128xbf16, #tpu.memory_space<vmem>>, vector<4x128xbf16>
    %3 = arith.extf %2 : vector<4x128xbf16> to vector<4x128xf32>
    %c0_3 = arith.constant 0 : index
    %c0_4 = arith.constant 0 : index
    %4 = vector.load %arg3[%c0_3, %c0_4] : memref<1x128xf32, #tpu.memory_space<vmem>>, vector<1x128xf32>
    %5 = vector.extract_strided_slice %1 {offsets = [0, 0], sizes = [512, 1], strides = [1, 1]} : vector<512x4xf32> to vector<512x1xf32>
    %6 = vector.extract_strided_slice %3 {offsets = [0, 0], sizes = [1, 128], strides = [1, 1]} : vector<4x128xf32> to vector<1x128xf32>
    %7 = vector.broadcast %5 : vector<512x1xf32> to vector<512x128xf32>
    %8 = vector.broadcast %6 : vector<1x128xf32> to vector<512x128xf32>
    %9 = arith.mulf %7, %8 : vector<512x128xf32>
    %10 = vector.broadcast %4 : vector<1x128xf32> to vector<512x128xf32>
    %11 = arith.addf %10, %9 : vector<512x128xf32>
    %12 = vector.extract_strided_slice %1 {offsets = [0, 1], sizes = [512, 1], strides = [1, 1]} : vector<512x4xf32> to vector<512x1xf32>
    %13 = vector.extract_strided_slice %3 {offsets = [1, 0], sizes = [1, 128], strides = [1, 1]} : vector<4x128xf32> to vector<1x128xf32>
    %14 = vector.broadcast %12 : vector<512x1xf32> to vector<512x128xf32>
    %15 = vector.broadcast %13 : vector<1x128xf32> to vector<512x128xf32>
    %16 = arith.mulf %14, %15 : vector<512x128xf32>
    %17 = arith.addf %11, %16 : vector<512x128xf32>
    %18 = vector.extract_strided_slice %1 {offsets = [0, 2], sizes = [512, 1], strides = [1, 1]} : vector<512x4xf32> to vector<512x1xf32>
    %19 = vector.extract_strided_slice %3 {offsets = [2, 0], sizes = [1, 128], strides = [1, 1]} : vector<4x128xf32> to vector<1x128xf32>
    %20 = vector.broadcast %18 : vector<512x1xf32> to vector<512x128xf32>
    %21 = vector.broadcast %19 : vector<1x128xf32> to vector<512x128xf32>
    %22 = arith.mulf %20, %21 : vector<512x128xf32>
    %23 = arith.addf %17, %22 : vector<512x128xf32>
    %24 = vector.extract_strided_slice %1 {offsets = [0, 3], sizes = [512, 1], strides = [1, 1]} : vector<512x4xf32> to vector<512x1xf32>
    %25 = vector.extract_strided_slice %3 {offsets = [3, 0], sizes = [1, 128], strides = [1, 1]} : vector<4x128xf32> to vector<1x128xf32>
    %26 = vector.broadcast %24 : vector<512x1xf32> to vector<512x128xf32>
    %27 = vector.broadcast %25 : vector<1x128xf32> to vector<512x128xf32>
    %28 = arith.mulf %26, %27 : vector<512x128xf32>
    %29 = arith.addf %23, %28 : vector<512x128xf32>
    %cst = arith.constant 0.000000e+00 : f32
    %30 = vector.broadcast %cst : f32 to vector<512x128xf32>
    %31 = arith.maximumf %29, %30 : vector<512x128xf32>
    %32 = arith.truncf %31 : vector<512x128xf32> to vector<512x128xbf16>
    %c0_5 = arith.constant 0 : index
    %c0_6 = arith.constant 0 : index
    %33 = vector.load %arg4[%c0_5, %c0_6] : memref<128x128xbf16, #tpu.memory_space<vmem>>, vector<128x128xbf16>
    %cst_7 = arith.constant dense<0.000000e+00> : vector<512x128xf32>
    %34 = tpu.matmul %32, %33, %cst_7 {dimension_numbers = #tpu.dot_dimension_numbers<[1], [0], [0], [1], [0, 0, 1, 1], [], []>} : vector<512x128xbf16>, vector<128x128xbf16>, vector<512x128xf32> -> vector<512x128xf32>
    %c0_8 = arith.constant 0 : index
    %c0_9 = arith.constant 0 : index
    %35 = vector.load %arg5[%c0_8, %c0_9] : memref<1x128xf32, #tpu.memory_space<vmem>>, vector<1x128xf32>
    %36 = vector.broadcast %35 : vector<1x128xf32> to vector<512x128xf32>
    %37 = arith.addf %34, %36 : vector<512x128xf32>
    %38 = arith.truncf %37 : vector<512x128xf32> to vector<512x128xbf16>
    %c0_10 = arith.constant 0 : index
    %c0_11 = arith.constant 0 : index
    %39 = vector.load %arg6[%c0_10, %c0_11] : memref<512x128xbf16, #tpu.memory_space<vmem>>, vector<512x128xbf16>
    tpu.vector_store %arg6[%c0_10, %c0_11], %38 {strides = array<i32>} : memref<512x128xbf16, #tpu.memory_space<vmem>>, vector<512x128xbf16>,
    return
  }
  func.func @transform_0(%arg0: i32) -> (i32, i32) {
    %c0_i32 = arith.constant 0 : i32
    %c0_i32_0 = arith.constant 0 : i32
    return %arg0, %c0_i32 : i32, i32
  }
  func.func @transform_1(%arg0: i32) -> (i32, i32) {
    %c0_i32 = arith.constant 0 : i32
    %c0_i32_0 = arith.constant 0 : i32
    %c0_i32_1 = arith.constant 0 : i32
    return %c0_i32, %c0_i32_0 : i32, i32
  }
  func.func @transform_2(%arg0: i32) -> (i32, i32) {
    %c0_i32 = arith.constant 0 : i32
    %c0_i32_0 = arith.constant 0 : i32
    %c0_i32_1 = arith.constant 0 : i32
    return %c0_i32, %c0_i32_0 : i32, i32
  }
  func.func @transform_3(%arg0: i32) -> (i32, i32) {
    %c0_i32 = arith.constant 0 : i32
    %c0_i32_0 = arith.constant 0 : i32
    %c0_i32_1 = arith.constant 0 : i32
    return %c0_i32, %c0_i32_0 : i32, i32
  }
  func.func @transform_4(%arg0: i32) -> (i32, i32) {
    %c0_i32 = arith.constant 0 : i32
    %c0_i32_0 = arith.constant 0 : i32
    %c0_i32_1 = arith.constant 0 : i32
    return %c0_i32, %c0_i32_0 : i32, i32
  }
  func.func @transform_5(%arg0: i32) -> (i32, i32) {
    %c0_i32 = arith.constant 0 : i32
    %c0_i32_0 = arith.constant 0 : i32
    return %arg0, %c0_i32 : i32, i32
  }
}

</mosaic_0001>

<llo_original>
// kernel: tpu_custom_call.1
$region0: #{tpu_custom_call.1}
  #allocation0 [shape = 'u32[]', space=smem, size = 0x4, offset = 0x4, fixed_abs, tag = 'smem constant byte address 0x4 - core index']
  #allocation1 [shape = 'u32[72,128]{1,0:T(1,128)}', space=vmem, size = 0x9000, scoped, tag = 'internal scratch']
  %s0 = inlined_call_operand.vmem [shape: bf16[512,4], index: 0, kind: input, shape index: {}]
  %s1 = inlined_call_operand.vmem [shape: bf16[4,128], index: 1, kind: input, shape index: {}]
  %s2 = inlined_call_operand.vmem [shape: f32[1,128], index: 2, kind: input, shape index: {}]
  %s3 = inlined_call_operand.vmem [shape: bf16[128,128], index: 3, kind: input, shape index: {}]
  %s4 = inlined_call_operand.vmem [shape: f32[1,128], index: 4, kind: input, shape index: {}]
  %s5 = inlined_call_operand.hbm [shape: bf16[512,128], index: 5, kind: output, shape index: {}]
  %s6 = sld [smem:[#allocation0]]
  $region30: #{tpu_custom_call.1} parent=0
    _
  %s8 = ssub.s32 1, %s6
  %s9 = scalar_select 0, %s8, %s6
  $region1: #{tpu_custom_call.1} parent=0
    #allocation2 [shape = 'u8[131072]{0}', space=vmem, size = 0x20000, scoped, tag = 'output window, operand 0, single buffered']
    #allocation3 [shape = 's32[1]{0}', space=sflag, size = 0x4, scoped, tag = 'scoped memory for tpu_custom_call.1']
    %10 = vsyncpa [#allocation3], 0
    // Predicated region
    $region2: #{tpu_custom_call.1} parent=1 // pred_check
      _
    $region3: #{tpu_custom_call.1} parent=1 // pred_check_branch
      %12 = sbr.rel (0) target = $region5
    $region4: #{tpu_custom_call.1} parent=1 // pred_region
      _
    $region5: #{tpu_custom_call.1} parent=1 // pred_fallthru
      _
    // Predicated region
    $region6: #{tpu_custom_call.1} parent=1 // pred_check
      _
    $region7: #{tpu_custom_call.1} parent=1 // pred_check_branch
      %14 = sbr.rel (0) target = $region9
    $region8: #{tpu_custom_call.1} parent=1 // pred_region
      _
    $region9: #{tpu_custom_call.1} parent=1 // pred_fallthru
      _
    // Predicated region
    $region10: #{tpu_custom_call.1} parent=1 // pred_check
      _
    $region11: #{tpu_custom_call.1} parent=1 // pred_check_branch
      %16 = sbr.rel (0) target = $region13
    $region12: #{tpu_custom_call.1} parent=1 // pred_region
      _
    $region13: #{tpu_custom_call.1} parent=1 // pred_fallthru
      _
    // Predicated region
    $region14: #{tpu_custom_call.1} parent=1 // pred_check
      _
    $region15: #{tpu_custom_call.1} parent=1 // pred_check_branch
      %18 = sbr.rel (0) target = $region17
    $region16: #{tpu_custom_call.1} parent=1 // pred_region
      _
    $region17: #{tpu_custom_call.1} parent=1 // pred_fallthru
      _
    // Predicated region
    $region18: #{tpu_custom_call.1} parent=1 // pred_check
      _
    $region19: #{tpu_custom_call.1} parent=1 // pred_check_branch
      %20 = sbr.rel (0) target = $region21
    $region20: #{tpu_custom_call.1} parent=1 // pred_region
      _
    $region21: #{tpu_custom_call.1} parent=1 // pred_fallthru
      _
    %v21 = vld [vmem:[%s0] sm:$0xf]
    %v22 = vld [vmem:[%s0 + $0x4] sm:$0xf]
    %v23 = vld [vmem:[%s0 + $0x8] sm:$0xf]
    %v24 = vld [vmem:[%s0 + $0xc] sm:$0xf]
    %v25 = vld [vmem:[%s0 + $0x10] sm:$0xf]
    %v26 = vld [vmem:[%s0 + $0x14] sm:$0xf]
    %v27 = vld [vmem:[%s0 + $0x18] sm:$0xf]
    %v28 = vld [vmem:[%s0 + $0x1c] sm:$0xf]
    %v29 = vld [vmem:[%s0 + $0x20] sm:$0xf]
    %v30 = vld [vmem:[%s0 + $0x24] sm:$0xf]
    %v31 = vld [vmem:[%s0 + $0x28] sm:$0xf]
    %v32 = vld [vmem:[%s0 + $0x2c] sm:$0xf]
    %v33 = vld [vmem:[%s0 + $0x30] sm:$0xf]
    %v34 = vld [vmem:[%s0 + $0x34] sm:$0xf]
    %v35 = vld [vmem:[%s0 + $0x38] sm:$0xf]
    %v36 = vld [vmem:[%s0 + $0x3c] sm:$0xf]
    %v37 = vld [vmem:[%s0 + $0x40] sm:$0xf]
    %v38 = vld [vmem:[%s0 + $0x44] sm:$0xf]
    %v39 = vld [vmem:[%s0 + $0x48] sm:$0xf]
    %v40 = vld [vmem:[%s0 + $0x4c] sm:$0xf]
    %v41 = vld [vmem:[%s0 + $0x50] sm:$0xf]
    %v42 = vld [vmem:[%s0 + $0x54] sm:$0xf]
    %v43 = vld [vmem:[%s0 + $0x58] sm:$0xf]
    %v44 = vld [vmem:[%s0 + $0x5c] sm:$0xf]
    %v45 = vld [vmem:[%s0 + $0x60] sm:$0xf]
    %v46 = vld [vmem:[%s0 + $0x64] sm:$0xf]
    %v47 = vld [vmem:[%s0 + $0x68] sm:$0xf]
    %v48 = vld [vmem:[%s0 + $0x6c] sm:$0xf]
    %v49 = vld [vmem:[%s0 + $0x70] sm:$0xf]
    %v50 = vld [vmem:[%s0 + $0x74] sm:$0xf]
    %v51 = vld [vmem:[%s0 + $0x78] sm:$0xf]
    %v52 = vld [vmem:[%s0 + $0x7c] sm:$0xf]
    %v53 = vld [vmem:[%s0 + $0x80] sm:$0xf]
    %v54 = vld [vmem:[%s0 + $0x84] sm:$0xf]
    %v55 = vld [vmem:[%s0 + $0x88] sm:$0xf]
    %v56 = vld [vmem:[%s0 + $0x8c] sm:$0xf]
    %v57 = vld [vmem:[%s0 + $0x90] sm:$0xf]
    %v58 = vld [vmem:[%s0 + $0x94] sm:$0xf]
    %v59 = vld [vmem:[%s0 + $0x98] sm:$0xf]
    %v60 = vld [vmem:[%s0 + $0x9c] sm:$0xf]
    %v61 = vld [vmem:[%s0 + $0xa0] sm:$0xf]
    %v62 = vld [vmem:[%s0 + $0xa4] sm:$0xf]
    %v63 = vld [vmem:[%s0 + $0xa8] sm:$0xf]
    %v64 = vld [vmem:[%s0 + $0xac] sm:$0xf]
    %v65 = vld [vmem:[%s0 + $0xb0] sm:$0xf]
    %v66 = vld [vmem:[%s0 + $0xb4] sm:$0xf]
    %v67 = vld [vmem:[%s0 + $0xb8] sm:$0xf]
    %v68 = vld [vmem:[%s0 + $0xbc] sm:$0xf]
    %v69 = vld [vmem:[%s0 + $0xc0] sm:$0xf]
    %v70 = vld [vmem:[%s0 + $0xc4] sm:$0xf]
    %v71 = vld [vmem:[%s0 + $0xc8] sm:$0xf]
    %v72 = vld [vmem:[%s0 + $0xcc] sm:$0xf]
    %v73 = vld [vmem:[%s0 + $0xd0] sm:$0xf]
    %v74 = vld [vmem:[%s0 + $0xd4] sm:$0xf]
    %v75 = vld [vmem:[%s0 + $0xd8] sm:$0xf]
    %v76 = vld [vmem:[%s0 + $0xdc] sm:$0xf]
    %v77 = vld [vmem:[%s0 + $0xe0] sm:$0xf]
    %v78 = vld [vmem:[%s0 + $0xe4] sm:$0xf]
    %v79 = vld [vmem:[%s0 + $0xe8] sm:$0xf]
    %v80 = vld [vmem:[%s0 + $0xec] sm:$0xf]
    %v81 = vld [vmem:[%s0 + $0xf0] sm:$0xf]
    %v82 = vld [vmem:[%s0 + $0xf4] sm:$0xf]
    %v83 = vld [vmem:[%s0 + $0xf8] sm:$0xf]
    %v84 = vld [vmem:[%s0 + $0xfc] sm:$0xf]
    %v85 = vunpack.c.l.bf16 %v21
    %v86 = vunpack.c.l.bf16 %v22
    %v87 = vunpack.c.l.bf16 %v23
    %v88 = vunpack.c.l.bf16 %v24
    %v89 = vunpack.c.l.bf16 %v25
    %v90 = vunpack.c.l.bf16 %v26
    %v91 = vunpack.c.l.bf16 %v27
    %v92 = vunpack.c.l.bf16 %v28
    %v93 = vunpack.c.l.bf16 %v29
    %v94 = vunpack.c.l.bf16 %v30
    %v95 = vunpack.c.l.bf16 %v31
    %v96 = vunpack.c.l.bf16 %v32
    %v97 = vunpack.c.l.bf16 %v33
    %v98 = vunpack.c.l.bf16 %v34
    %v99 = vunpack.c.l.bf16 %v35
    %v100 = vunpack.c.l.bf16 %v36
    %v101 = vunpack.c.l.bf16 %v37
    %v102 = vunpack.c.l.bf16 %v38
    %v103 = vunpack.c.l.bf16 %v39
    %v104 = vunpack.c.l.bf16 %v40
    %v105 = vunpack.c.l.bf16 %v41
    %v106 = vunpack.c.l.bf16 %v42
    %v107 = vunpack.c.l.bf16 %v43
    %v108 = vunpack.c.l.bf16 %v44
    %v109 = vunpack.c.l.bf16 %v45
    %v110 = vunpack.c.l.bf16 %v46
    %v111 = vunpack.c.l.bf16 %v47
    %v112 = vunpack.c.l.bf16 %v48
    %v113 = vunpack.c.l.bf16 %v49
    %v114 = vunpack.c.l.bf16 %v50
    %v115 = vunpack.c.l.bf16 %v51
    %v116 = vunpack.c.l.bf16 %v52
    %v117 = vunpack.c.l.bf16 %v53
    %v118 = vunpack.c.l.bf16 %v54
    %v119 = vunpack.c.l.bf16 %v55
    %v120 = vunpack.c.l.bf16 %v56
    %v121 = vunpack.c.l.bf16 %v57
    %v122 = vunpack.c.l.bf16 %v58
    %v123 = vunpack.c.l.bf16 %v59
    %v124 = vunpack.c.l.bf16 %v60
    %v125 = vunpack.c.l.bf16 %v61
    %v126 = vunpack.c.l.bf16 %v62
    %v127 = vunpack.c.l.bf16 %v63
    %v128 = vunpack.c.l.bf16 %v64
    %v129 = vunpack.c.l.bf16 %v65
    %v130 = vunpack.c.l.bf16 %v66
    %v131 = vunpack.c.l.bf16 %v67
    %v132 = vunpack.c.l.bf16 %v68
    %v133 = vunpack.c.l.bf16 %v69
    %v134 = vunpack.c.l.bf16 %v70
    %v135 = vunpack.c.l.bf16 %v71
    %v136 = vunpack.c.l.bf16 %v72
    %v137 = vunpack.c.l.bf16 %v73
    %v138 = vunpack.c.l.bf16 %v74
    %v139 = vunpack.c.l.bf16 %v75
    %v140 = vunpack.c.l.bf16 %v76
    %v141 = vunpack.c.l.bf16 %v77
    %v142 = vunpack.c.l.bf16 %v78
    %v143 = vunpack.c.l.bf16 %v79
    %v144 = vunpack.c.l.bf16 %v80
    %v145 = vunpack.c.l.bf16 %v81
    %v146 = vunpack.c.l.bf16 %v82
    %v147 = vunpack.c.l.bf16 %v83
    %v148 = vunpack.c.l.bf16 %v84
    %v149 = vld [vmem:[%s1] sm:$0x3]
    %v150 = vunpack.c.l.bf16 %v149
    %v151 = vld [vmem:[%s2] sm:$0x1]
    %153 = vset.pattern.permute.xlu0 0
    %154 = vperm.xlu0 %153, %v85
    %v155 = vpop.permute.xlu0 %154
    %158 = vset.pattern.permute.xlu0 0
    %159 = vperm.xlu0 %158, %v86
    %v160 = vpop.permute.xlu0 %159
    %163 = vset.pattern.permute.xlu0 0
    %164 = vperm.xlu0 %163, %v87
    %v165 = vpop.permute.xlu0 %164
    %168 = vset.pattern.permute.xlu0 0
    %169 = vperm.xlu0 %168, %v88
    %v170 = vpop.permute.xlu0 %169
    %173 = vset.pattern.permute.xlu0 0
    %174 = vperm.xlu0 %173, %v89
    %v175 = vpop.permute.xlu0 %174
    %178 = vset.pattern.permute.xlu0 0
    %179 = vperm.xlu0 %178, %v90
    %v180 = vpop.permute.xlu0 %179
    %183 = vset.pattern.permute.xlu0 0
    %184 = vperm.xlu0 %183, %v91
    %v185 = vpop.permute.xlu0 %184
    %188 = vset.pattern.permute.xlu0 0
    %189 = vperm.xlu0 %188, %v92
    %v190 = vpop.permute.xlu0 %189
    %193 = vset.pattern.permute.xlu0 0
    %194 = vperm.xlu0 %193, %v93
    %v195 = vpop.permute.xlu0 %194
    %198 = vset.pattern.permute.xlu0 0
    %199 = vperm.xlu0 %198, %v94
    %v200 = vpop.permute.xlu0 %199
    %203 = vset.pattern.permute.xlu0 0
    %204 = vperm.xlu0 %203, %v95
    %v205 = vpop.permute.xlu0 %204
    %208 = vset.pattern.permute.xlu0 0
    %209 = vperm.xlu0 %208, %v96
    %v210 = vpop.permute.xlu0 %209
    %213 = vset.pattern.permute.xlu0 0
    %214 = vperm.xlu0 %213, %v97
    %v215 = vpop.permute.xlu0 %214
    %218 = vset.pattern.permute.xlu0 0
    %219 = vperm.xlu0 %218, %v98
    %v220 = vpop.permute.xlu0 %219
    %223 = vset.pattern.permute.xlu0 0
    %224 = vperm.xlu0 %223, %v99
    %v225 = vpop.permute.xlu0 %224
    %228 = vset.pattern.permute.xlu0 0
    %229 = vperm.xlu0 %228, %v100
    %v230 = vpop.permute.xlu0 %229
    %233 = vset.pattern.permute.xlu0 0
    %234 = vperm.xlu0 %233, %v101
    %v235 = vpop.permute.xlu0 %234
    %238 = vset.pattern.permute.xlu0 0
    %239 = vperm.xlu0 %238, %v102
    %v240 = vpop.permute.xlu0 %239
    %243 = vset.pattern.permute.xlu0 0
    %244 = vperm.xlu0 %243, %v103
    %v245 = vpop.permute.xlu0 %244
    %248 = vset.pattern.permute.xlu0 0
    %249 = vperm.xlu0 %248, %v104
    %v250 = vpop.permute.xlu0 %249
    %253 = vset.pattern.permute.xlu0 0
    %254 = vperm.xlu0 %253, %v105
    %v255 = vpop.permute.xlu0 %254
    %258 = vset.pattern.permute.xlu0 0
    %259 = vperm.xlu0 %258, %v106
    %v260 = vpop.permute.xlu0 %259
    %263 = vset.pattern.permute.xlu0 0
    %264 = vperm.xlu0 %263, %v107
    %v265 = vpop.permute.xlu0 %264
    %268 = vset.pattern.permute.xlu0 0
    %269 = vperm.xlu0 %268, %v108
    %v270 = vpop.permute.xlu0 %269
    %273 = vset.pattern.permute.xlu0 0
    %274 = vperm.xlu0 %273, %v109
    %v275 = vpop.permute.xlu0 %274
    %278 = vset.pattern.permute.xlu0 0
    %279 = vperm.xlu0 %278, %v110
    %v280 = vpop.permute.xlu0 %279
    %283 = vset.pattern.permute.xlu0 0
    %284 = vperm.xlu0 %283, %v111
    %v285 = vpop.permute.xlu0 %284
    %288 = vset.pattern.permute.xlu0 0
    %289 = vperm.xlu0 %288, %v112
    %v290 = vpop.permute.xlu0 %289
    %293 = vset.pattern.permute.xlu0 0
    %294 = vperm.xlu0 %293, %v113
    %v295 = vpop.permute.xlu0 %294
    %298 = vset.pattern.permute.xlu0 0
    %299 = vperm.xlu0 %298, %v114
    %v300 = vpop.permute.xlu0 %299
    %303 = vset.pattern.permute.xlu0 0
    %304 = vperm.xlu0 %303, %v115
    %v305 = vpop.permute.xlu0 %304
    %308 = vset.pattern.permute.xlu0 0
    %309 = vperm.xlu0 %308, %v116
    %v310 = vpop.permute.xlu0 %309
    %313 = vset.pattern.permute.xlu0 0
    %314 = vperm.xlu0 %313, %v117
    %v315 = vpop.permute.xlu0 %314
    %318 = vset.pattern.permute.xlu0 0
    %319 = vperm.xlu0 %318, %v118
    %v320 = vpop.permute.xlu0 %319
    %323 = vset.pattern.permute.xlu0 0
    %324 = vperm.xlu0 %323, %v119
    %v325 = vpop.permute.xlu0 %324
    %328 = vset.pattern.permute.xlu0 0
    %329 = vperm.xlu0 %328, %v120
    %v330 = vpop.permute.xlu0 %329
    %333 = vset.pattern.permute.xlu0 0
    %334 = vperm.xlu0 %333, %v121
    %v335 = vpop.permute.xlu0 %334
    %338 = vset.pattern.permute.xlu0 0
    %339 = vperm.xlu0 %338, %v122
    %v340 = vpop.permute.xlu0 %339
    %343 = vset.pattern.permute.xlu0 0
    %344 = vperm.xlu0 %343, %v123
    %v345 = vpop.permute.xlu0 %344
    %348 = vset.pattern.permute.xlu0 0
    %349 = vperm.xlu0 %348, %v124
    %v350 = vpop.permute.xlu0 %349
    %353 = vset.pattern.permute.xlu0 0
    %354 = vperm.xlu0 %353, %v125
    %v355 = vpop.permute.xlu0 %354
    %358 = vset.pattern.permute.xlu0 0
    %359 = vperm.xlu0 %358, %v126
    %v360 = vpop.permute.xlu0 %359
    %363 = vset.pattern.permute.xlu0 0
    %364 = vperm.xlu0 %363, %v127
    %v365 = vpop.permute.xlu0 %364
    %368 = vset.pattern.permute.xlu0 0
    %369 = vperm.xlu0 %368, %v128
    %v370 = vpop.permute.xlu0 %369
    %373 = vset.pattern.permute.xlu0 0
    %374 = vperm.xlu0 %373, %v129
    %v375 = vpop.permute.xlu0 %374
    %378 = vset.pattern.permute.xlu0 0
    %379 = vperm.xlu0 %378, %v130
    %v380 = vpop.permute.xlu0 %379
    %383 = vset.pattern.permute.xlu0 0
    %384 = vperm.xlu0 %383, %v131
    %v385 = vpop.permute.xlu0 %384
    %388 = vset.pattern.permute.xlu0 0
    %389 = vperm.xlu0 %388, %v132
    %v390 = vpop.permute.xlu0 %389
    %393 = vset.pattern.permute.xlu0 0
    %394 = vperm.xlu0 %393, %v133
    %v395 = vpop.permute.xlu0 %394
    %398 = vset.pattern.permute.xlu0 0
    %399 = vperm.xlu0 %398, %v134
    %v400 = vpop.permute.xlu0 %399
    %403 = vset.pattern.permute.xlu0 0
    %404 = vperm.xlu0 %403, %v135
    %v405 = vpop.permute.xlu0 %404
    %408 = vset.pattern.permute.xlu0 0
    %409 = vperm.xlu0 %408, %v136
    %v410 = vpop.permute.xlu0 %409
    %413 = vset.pattern.permute.xlu0 0
    %414 = vperm.xlu0 %413, %v137
    %v415 = vpop.permute.xlu0 %414
    %418 = vset.pattern.permute.xlu0 0
    %419 = vperm.xlu0 %418, %v138
    %v420 = vpop.permute.xlu0 %419
    %423 = vset.pattern.permute.xlu0 0
    %424 = vperm.xlu0 %423, %v139
    %v425 = vpop.permute.xlu0 %424
    %428 = vset.pattern.permute.xlu0 0
    %429 = vperm.xlu0 %428, %v140
    %v430 = vpop.permute.xlu0 %429
    %433 = vset.pattern.permute.xlu0 0
    %434 = vperm.xlu0 %433, %v141
    %v435 = vpop.permute.xlu0 %434
    %438 = vset.pattern.permute.xlu0 0
    %439 = vperm.xlu0 %438, %v142
    %v440 = vpop.permute.xlu0 %439
    %443 = vset.pattern.permute.xlu0 0
    %444 = vperm.xlu0 %443, %v143
    %v445 = vpop.permute.xlu0 %444
    %448 = vset.pattern.permute.xlu0 0
    %449 = vperm.xlu0 %448, %v144
    %v450 = vpop.permute.xlu0 %449
    %453 = vset.pattern.permute.xlu0 0
    %454 = vperm.xlu0 %453, %v145
    %v455 = vpop.permute.xlu0 %454
    %458 = vset.pattern.permute.xlu0 0
    %459 = vperm.xlu0 %458, %v146
    %v460 = vpop.permute.xlu0 %459
    %463 = vset.pattern.permute.xlu0 0
    %464 = vperm.xlu0 %463, %v147
    %v465 = vpop.permute.xlu0 %464
    %468 = vset.pattern.permute.xlu0 0
    %469 = vperm.xlu0 %468, %v148
    %v470 = vpop.permute.xlu0 %469
    %v472 = vperm.slane %v150, 0
    %v473 = vmul.f32 %v155, %v472
    %v474 = vmul.f32 %v160, %v472
    %v475 = vmul.f32 %v165, %v472
    %v476 = vmul.f32 %v170, %v472
    %v477 = vmul.f32 %v175, %v472
    %v478 = vmul.f32 %v180, %v472
    %v479 = vmul.f32 %v185, %v472
    %v480 = vmul.f32 %v190, %v472
    %v481 = vmul.f32 %v195, %v472
    %v482 = vmul.f32 %v200, %v472
    %v483 = vmul.f32 %v205, %v472
    %v484 = vmul.f32 %v210, %v472
    %v485 = vmul.f32 %v215, %v472
    %v486 = vmul.f32 %v220, %v472
    %v487 = vmul.f32 %v225, %v472
    %v488 = vmul.f32 %v230, %v472
    %v489 = vmul.f32 %v235, %v472
    %v490 = vmul.f32 %v240, %v472
    %v491 = vmul.f32 %v245, %v472
    %v492 = vmul.f32 %v250, %v472
    %v493 = vmul.f32 %v255, %v472
    %v494 = vmul.f32 %v260, %v472
    %v495 = vmul.f32 %v265, %v472
    %v496 = vmul.f32 %v270, %v472
    %v497 = vmul.f32 %v275, %v472
    %v498 = vmul.f32 %v280, %v472
    %v499 = vmul.f32 %v285, %v472
    %v500 = vmul.f32 %v290, %v472
    %v501 = vmul.f32 %v295, %v472
    %v502 = vmul.f32 %v300, %v472
    %v503 = vmul.f32 %v305, %v472
    %v504 = vmul.f32 %v310, %v472
    %v505 = vmul.f32 %v315, %v472
    %v506 = vmul.f32 %v320, %v472
    %v507 = vmul.f32 %v325, %v472
    %v508 = vmul.f32 %v330, %v472
    %v509 = vmul.f32 %v335, %v472
    %v510 = vmul.f32 %v340, %v472
    %v511 = vmul.f32 %v345, %v472
    %v512 = vmul.f32 %v350, %v472
    %v513 = vmul.f32 %v355, %v472
    %v514 = vmul.f32 %v360, %v472
    %v515 = vmul.f32 %v365, %v472
    %v516 = vmul.f32 %v370, %v472
    %v517 = vmul.f32 %v375, %v472
    %v518 = vmul.f32 %v380, %v472
    %v519 = vmul.f32 %v385, %v472
    %v520 = vmul.f32 %v390, %v472
    %v521 = vmul.f32 %v395, %v472
    %v522 = vmul.f32 %v400, %v472
    %v523 = vmul.f32 %v405, %v472
    %v524 = vmul.f32 %v410, %v472
    %v525 = vmul.f32 %v415, %v472
    %v526 = vmul.f32 %v420, %v472
    %v527 = vmul.f32 %v425, %v472
    %v528 = vmul.f32 %v430, %v472
    %v529 = vmul.f32 %v435, %v472
    %v530 = vmul.f32 %v440, %v472
    %v531 = vmul.f32 %v445, %v472
    %v532 = vmul.f32 %v450, %v472
    %v533 = vmul.f32 %v455, %v472
    %v534 = vmul.f32 %v460, %v472
    %v535 = vmul.f32 %v465, %v472
    %v536 = vmul.f32 %v470, %v472
    %v538 = vperm.slane %v151, 0
    %v540 = vadd.f32 %v538, %v473
    %v541 = vadd.f32 %v538, %v474
    %v542 = vadd.f32 %v538, %v475
    %v543 = vadd.f32 %v538, %v476
    %v544 = vadd.f32 %v538, %v477
    %v545 = vadd.f32 %v538, %v478
    %v546 = vadd.f32 %v538, %v479
    %v547 = vadd.f32 %v538, %v480
    %v548 = vadd.f32 %v538, %v481
    %v549 = vadd.f32 %v538, %v482
    %v550 = vadd.f32 %v538, %v483
    %v551 = vadd.f32 %v538, %v484
    %v552 = vadd.f32 %v538, %v485
    %v553 = vadd.f32 %v538, %v486
    %v554 = vadd.f32 %v538, %v487
    %v555 = vadd.f32 %v538, %v488
    %v556 = vadd.f32 %v538, %v489
    %v557 = vadd.f32 %v538, %v490
    %v558 = vadd.f32 %v538, %v491
    %v559 = vadd.f32 %v538, %v492
    %v560 = vadd.f32 %v538, %v493
    %v561 = vadd.f32 %v538, %v494
    %v562 = vadd.f32 %v538, %v495
    %v563 = vadd.f32 %v538, %v496
    %v564 = vadd.f32 %v538, %v497
    %v565 = vadd.f32 %v538, %v498
    %v566 = vadd.f32 %v538, %v499
    %v567 = vadd.f32 %v538, %v500
    %v568 = vadd.f32 %v538, %v501
    %v569 = vadd.f32 %v538, %v502
    %v570 = vadd.f32 %v538, %v503
    %v571 = vadd.f32 %v538, %v504
    %v572 = vadd.f32 %v538, %v505
    %v573 = vadd.f32 %v538, %v506
    %v574 = vadd.f32 %v538, %v507
    %v575 = vadd.f32 %v538, %v508
    %v576 = vadd.f32 %v538, %v509
    %v577 = vadd.f32 %v538, %v510
    %v578 = vadd.f32 %v538, %v511
    %v579 = vadd.f32 %v538, %v512
    %v580 = vadd.f32 %v538, %v513
    %v581 = vadd.f32 %v538, %v514
    %v582 = vadd.f32 %v538, %v515
    %v583 = vadd.f32 %v538, %v516
    %v584 = vadd.f32 %v538, %v517
    %v585 = vadd.f32 %v538, %v518
    %v586 = vadd.f32 %v538, %v519
    %v587 = vadd.f32 %v538, %v520
    %v588 = vadd.f32 %v538, %v521
    %v589 = vadd.f32 %v538, %v522
    %v590 = vadd.f32 %v538, %v523
    %v591 = vadd.f32 %v538, %v524
    %v592 = vadd.f32 %v538, %v525
    %v593 = vadd.f32 %v538, %v526
    %v594 = vadd.f32 %v538, %v527
    %v595 = vadd.f32 %v538, %v528
    %v596 = vadd.f32 %v538, %v529
    %v597 = vadd.f32 %v538, %v530
    %v598 = vadd.f32 %v538, %v531
    %v599 = vadd.f32 %v538, %v532
    %v600 = vadd.f32 %v538, %v533
    %v601 = vadd.f32 %v538, %v534
    %v602 = vadd.f32 %v538, %v535
    %v603 = vadd.f32 %v538, %v536
    %604 = vset.pattern.permute.xlu0 1
    %605 = vperm.xlu0 %604, %v85
    %v606 = vpop.permute.xlu0 %605
    %608 = vset.pattern.permute.xlu0 1
    %609 = vperm.xlu0 %608, %v86
    %v610 = vpop.permute.xlu0 %609
    %612 = vset.pattern.permute.xlu0 1
    %613 = vperm.xlu0 %612, %v87
    %v614 = vpop.permute.xlu0 %613
    %616 = vset.pattern.permute.xlu0 1
    %617 = vperm.xlu0 %616, %v88
    %v618 = vpop.permute.xlu0 %617
    %620 = vset.pattern.permute.xlu0 1
    %621 = vperm.xlu0 %620, %v89
    %v622 = vpop.permute.xlu0 %621
    %624 = vset.pattern.permute.xlu0 1
    %625 = vperm.xlu0 %624, %v90
    %v626 = vpop.permute.xlu0 %625
    %628 = vset.pattern.permute.xlu0 1
    %629 = vperm.xlu0 %628, %v91
    %v630 = vpop.permute.xlu0 %629
    %632 = vset.pattern.permute.xlu0 1
    %633 = vperm.xlu0 %632, %v92
    %v634 = vpop.permute.xlu0 %633
    %636 = vset.pattern.permute.xlu0 1
    %637 = vperm.xlu0 %636, %v93
    %v638 = vpop.permute.xlu0 %637
    %640 = vset.pattern.permute.xlu0 1
    %641 = vperm.xlu0 %640, %v94
    %v642 = vpop.permute.xlu0 %641
    %644 = vset.pattern.permute.xlu0 1
    %645 = vperm.xlu0 %644, %v95
    %v646 = vpop.permute.xlu0 %645
    %648 = vset.pattern.permute.xlu0 1
    %649 = vperm.xlu0 %648, %v96
    %v650 = vpop.permute.xlu0 %649
    %652 = vset.pattern.permute.xlu0 1
    %653 = vperm.xlu0 %652, %v97
    %v654 = vpop.permute.xlu0 %653
    %656 = vset.pattern.permute.xlu0 1
    %657 = vperm.xlu0 %656, %v98
    %v658 = vpop.permute.xlu0 %657
    %660 = vset.pattern.permute.xlu0 1
    %661 = vperm.xlu0 %660, %v99
    %v662 = vpop.permute.xlu0 %661
    %664 = vset.pattern.permute.xlu0 1
    %665 = vperm.xlu0 %664, %v100
    %v666 = vpop.permute.xlu0 %665
    %668 = vset.pattern.permute.xlu0 1
    %669 = vperm.xlu0 %668, %v101
    %v670 = vpop.permute.xlu0 %669
    %672 = vset.pattern.permute.xlu0 1
    %673 = vperm.xlu0 %672, %v102
    %v674 = vpop.permute.xlu0 %673
    %676 = vset.pattern.permute.xlu0 1
    %677 = vperm.xlu0 %676, %v103
    %v678 = vpop.permute.xlu0 %677
    %680 = vset.pattern.permute.xlu0 1
    %681 = vperm.xlu0 %680, %v104
    %v682 = vpop.permute.xlu0 %681
    %684 = vset.pattern.permute.xlu0 1
    %685 = vperm.xlu0 %684, %v105
    %v686 = vpop.permute.xlu0 %685
    %688 = vset.pattern.permute.xlu0 1
    %689 = vperm.xlu0 %688, %v106
    %v690 = vpop.permute.xlu0 %689
    %692 = vset.pattern.permute.xlu0 1
    %693 = vperm.xlu0 %692, %v107
    %v694 = vpop.permute.xlu0 %693
    %696 = vset.pattern.permute.xlu0 1
    %697 = vperm.xlu0 %696, %v108
    %v698 = vpop.permute.xlu0 %697
    %700 = vset.pattern.permute.xlu0 1
    %701 = vperm.xlu0 %700, %v109
    %v702 = vpop.permute.xlu0 %701
    %704 = vset.pattern.permute.xlu0 1
    %705 = vperm.xlu0 %704, %v110
    %v706 = vpop.permute.xlu0 %705
    %708 = vset.pattern.permute.xlu0 1
    %709 = vperm.xlu0 %708, %v111
    %v710 = vpop.permute.xlu0 %709
    %712 = vset.pattern.permute.xlu0 1
    %713 = vperm.xlu0 %712, %v112
    %v714 = vpop.permute.xlu0 %713
    %716 = vset.pattern.permute.xlu0 1
    %717 = vperm.xlu0 %716, %v113
    %v718 = vpop.permute.xlu0 %717
    %720 = vset.pattern.permute.xlu0 1
    %721 = vperm.xlu0 %720, %v114
    %v722 = vpop.permute.xlu0 %721
    %724 = vset.pattern.permute.xlu0 1
    %725 = vperm.xlu0 %724, %v115
    %v726 = vpop.permute.xlu0 %725
    %728 = vset.pattern.permute.xlu0 1
    %729 = vperm.xlu0 %728, %v116
    %v730 = vpop.permute.xlu0 %729
    %732 = vset.pattern.permute.xlu0 1
    %733 = vperm.xlu0 %732, %v117
    %v734 = vpop.permute.xlu0 %733
    %736 = vset.pattern.permute.xlu0 1
    %737 = vperm.xlu0 %736, %v118
    %v738 = vpop.permute.xlu0 %737
    %740 = vset.pattern.permute.xlu0 1
    %741 = vperm.xlu0 %740, %v119
    %v742 = vpop.permute.xlu0 %741
    %744 = vset.pattern.permute.xlu0 1
    %745 = vperm.xlu0 %744, %v120
    %v746 = vpop.permute.xlu0 %745
    %748 = vset.pattern.permute.xlu0 1
    %749 = vperm.xlu0 %748, %v121
    %v750 = vpop.permute.xlu0 %749
    %752 = vset.pattern.permute.xlu0 1
    %753 = vperm.xlu0 %752, %v122
    %v754 = vpop.permute.xlu0 %753
    %756 = vset.pattern.permute.xlu0 1
    %757 = vperm.xlu0 %756, %v123
    %v758 = vpop.permute.xlu0 %757
    %760 = vset.pattern.permute.xlu0 1
    %761 = vperm.xlu0 %760, %v124
    %v762 = vpop.permute.xlu0 %761
    %764 = vset.pattern.permute.xlu0 1
    %765 = vperm.xlu0 %764, %v125
    %v766 = vpop.permute.xlu0 %765
    %768 = vset.pattern.permute.xlu0 1
    %769 = vperm.xlu0 %768, %v126
    %v770 = vpop.permute.xlu0 %769
    %772 = vset.pattern.permute.xlu0 1
    %773 = vperm.xlu0 %772, %v127
    %v774 = vpop.permute.xlu0 %773
    %776 = vset.pattern.permute.xlu0 1
    %777 = vperm.xlu0 %776, %v128
    %v778 = vpop.permute.xlu0 %777
    %780 = vset.pattern.permute.xlu0 1
    %781 = vperm.xlu0 %780, %v129
    %v782 = vpop.permute.xlu0 %781
    %784 = vset.pattern.permute.xlu0 1
    %785 = vperm.xlu0 %784, %v130
    %v786 = vpop.permute.xlu0 %785
    %788 = vset.pattern.permute.xlu0 1
    %789 = vperm.xlu0 %788, %v131
    %v790 = vpop.permute.xlu0 %789
    %792 = vset.pattern.permute.xlu0 1
    %793 = vperm.xlu0 %792, %v132
    %v794 = vpop.permute.xlu0 %793
    %796 = vset.pattern.permute.xlu0 1
    %797 = vperm.xlu0 %796, %v133
    %v798 = vpop.permute.xlu0 %797
    %800 = vset.pattern.permute.xlu0 1
    %801 = vperm.xlu0 %800, %v134
    %v802 = vpop.permute.xlu0 %801
    %804 = vset.pattern.permute.xlu0 1
    %805 = vperm.xlu0 %804, %v135
    %v806 = vpop.permute.xlu0 %805
    %808 = vset.pattern.permute.xlu0 1
    %809 = vperm.xlu0 %808, %v136
    %v810 = vpop.permute.xlu0 %809
    %812 = vset.pattern.permute.xlu0 1
    %813 = vperm.xlu0 %812, %v137
    %v814 = vpop.permute.xlu0 %813
    %816 = vset.pattern.permute.xlu0 1
    %817 = vperm.xlu0 %816, %v138
    %v818 = vpop.permute.xlu0 %817
    %820 = vset.pattern.permute.xlu0 1
    %821 = vperm.xlu0 %820, %v139
    %v822 = vpop.permute.xlu0 %821
    %824 = vset.pattern.permute.xlu0 1
    %825 = vperm.xlu0 %824, %v140
    %v826 = vpop.permute.xlu0 %825
    %828 = vset.pattern.permute.xlu0 1
    %829 = vperm.xlu0 %828, %v141
    %v830 = vpop.permute.xlu0 %829
    %832 = vset.pattern.permute.xlu0 1
    %833 = vperm.xlu0 %832, %v142
    %v834 = vpop.permute.xlu0 %833
    %836 = vset.pattern.permute.xlu0 1
    %837 = vperm.xlu0 %836, %v143
    %v838 = vpop.permute.xlu0 %837
    %840 = vset.pattern.permute.xlu0 1
    %841 = vperm.xlu0 %840, %v144
    %v842 = vpop.permute.xlu0 %841
    %844 = vset.pattern.permute.xlu0 1
    %845 = vperm.xlu0 %844, %v145
    %v846 = vpop.permute.xlu0 %845
    %848 = vset.pattern.permute.xlu0 1
    %849 = vperm.xlu0 %848, %v146
    %v850 = vpop.permute.xlu0 %849
    %852 = vset.pattern.permute.xlu0 1
    %853 = vperm.xlu0 %852, %v147
    %v854 = vpop.permute.xlu0 %853
    %856 = vset.pattern.permute.xlu0 1
    %857 = vperm.xlu0 %856, %v148
    %v858 = vpop.permute.xlu0 %857
    %v860 = vperm.slane %v150, 1
    %v861 = vmul.f32 %v606, %v860
    %v862 = vmul.f32 %v610, %v860
    %v863 = vmul.f32 %v614, %v860
    %v864 = vmul.f32 %v618, %v860
    %v865 = vmul.f32 %v622, %v860
    %v866 = vmul.f32 %v626, %v860
    %v867 = vmul.f32 %v630, %v860
    %v868 = vmul.f32 %v634, %v860
    %v869 = vmul.f32 %v638, %v860
    %v870 = vmul.f32 %v642, %v860
    %v871 = vmul.f32 %v646, %v860
    %v872 = vmul.f32 %v650, %v860
    %v873 = vmul.f32 %v654, %v860
    %v874 = vmul.f32 %v658, %v860
    %v875 = vmul.f32 %v662, %v860
    %v876 = vmul.f32 %v666, %v860
    %v877 = vmul.f32 %v670, %v860
    %v878 = vmul.f32 %v674, %v860
    %v879 = vmul.f32 %v678, %v860
    %v880 = vmul.f32 %v682, %v860
    %v881 = vmul.f32 %v686, %v860
    %v882 = vmul.f32 %v690, %v860
    %v883 = vmul.f32 %v694, %v860
    %v884 = vmul.f32 %v698, %v860
    %v885 = vmul.f32 %v702, %v860
    %v886 = vmul.f32 %v706, %v860
    %v887 = vmul.f32 %v710, %v860
    %v888 = vmul.f32 %v714, %v860
    %v889 = vmul.f32 %v718, %v860
    %v890 = vmul.f32 %v722, %v860
    %v891 = vmul.f32 %v726, %v860
    %v892 = vmul.f32 %v730, %v860
    %v893 = vmul.f32 %v734, %v860
    %v894 = vmul.f32 %v738, %v860
    %v895 = vmul.f32 %v742, %v860
    %v896 = vmul.f32 %v746, %v860
    %v897 = vmul.f32 %v750, %v860
    %v898 = vmul.f32 %v754, %v860
    %v899 = vmul.f32 %v758, %v860
    %v900 = vmul.f32 %v762, %v860
    %v901 = vmul.f32 %v766, %v860
    %v902 = vmul.f32 %v770, %v860
    %v903 = vmul.f32 %v774, %v860
    %v904 = vmul.f32 %v778, %v860
    %v905 = vmul.f32 %v782, %v860
    %v906 = vmul.f32 %v786, %v860
    %v907 = vmul.f32 %v790, %v860
    %v908 = vmul.f32 %v794, %v860
    %v909 = vmul.f32 %v798, %v860
    %v910 = vmul.f32 %v802, %v860
    %v911 = vmul.f32 %v806, %v860
    %v912 = vmul.f32 %v810, %v860
    %v913 = vmul.f32 %v814, %v860
    %v914 = vmul.f32 %v818, %v860
    %v915 = vmul.f32 %v822, %v860
    %v916 = vmul.f32 %v826, %v860
    %v917 = vmul.f32 %v830, %v860
    %v918 = vmul.f32 %v834, %v860
    %v919 = vmul.f32 %v838, %v860
    %v920 = vmul.f32 %v842, %v860
    %v921 = vmul.f32 %v846, %v860
    %v922 = vmul.f32 %v850, %v860
    %v923 = vmul.f32 %v854, %v860
    %v924 = vmul.f32 %v858, %v860
    %v925 = vadd.f32 %v540, %v861
    %v926 = vadd.f32 %v541, %v862
    %v927 = vadd.f32 %v542, %v863
    %v928 = vadd.f32 %v543, %v864
    %v929 = vadd.f32 %v544, %v865
    %v930 = vadd.f32 %v545, %v866
    %v931 = vadd.f32 %v546, %v867
    %v932 = vadd.f32 %v547, %v868
    %v933 = vadd.f32 %v548, %v869
    %v934 = vadd.f32 %v549, %v870
    %v935 = vadd.f32 %v550, %v871
    %v936 = vadd.f32 %v551, %v872
    %v937 = vadd.f32 %v552, %v873
    %v938 = vadd.f32 %v553, %v874
    %v939 = vadd.f32 %v554, %v875
    %v940 = vadd.f32 %v555, %v876
    %v941 = vadd.f32 %v556, %v877
    %v942 = vadd.f32 %v557, %v878
    %v943 = vadd.f32 %v558, %v879
    %v944 = vadd.f32 %v559, %v880
    %v945 = vadd.f32 %v560, %v881
    %v946 = vadd.f32 %v561, %v882
    %v947 = vadd.f32 %v562, %v883
    %v948 = vadd.f32 %v563, %v884
    %v949 = vadd.f32 %v564, %v885
    %v950 = vadd.f32 %v565, %v886
    %v951 = vadd.f32 %v566, %v887
    %v952 = vadd.f32 %v567, %v888
    %v953 = vadd.f32 %v568, %v889
    %v954 = vadd.f32 %v569, %v890
    %v955 = vadd.f32 %v570, %v891
    %v956 = vadd.f32 %v571, %v892
    %v957 = vadd.f32 %v572, %v893
    %v958 = vadd.f32 %v573, %v894
    %v959 = vadd.f32 %v574, %v895
    %v960 = vadd.f32 %v575, %v896
    %v961 = vadd.f32 %v576, %v897
    %v962 = vadd.f32 %v577, %v898
    %v963 = vadd.f32 %v578, %v899
    %v964 = vadd.f32 %v579, %v900
    %v965 = vadd.f32 %v580, %v901
    %v966 = vadd.f32 %v581, %v902
    %v967 = vadd.f32 %v582, %v903
    %v968 = vadd.f32 %v583, %v904
    %v969 = vadd.f32 %v584, %v905
    %v970 = vadd.f32 %v585, %v906
    %v971 = vadd.f32 %v586, %v907
    %v972 = vadd.f32 %v587, %v908
    %v973 = vadd.f32 %v588, %v909
    %v974 = vadd.f32 %v589, %v910
    %v975 = vadd.f32 %v590, %v911
    %v976 = vadd.f32 %v591, %v912
    %v977 = vadd.f32 %v592, %v913
    %v978 = vadd.f32 %v593, %v914
    %v979 = vadd.f32 %v594, %v915
    %v980 = vadd.f32 %v595, %v916
    %v981 = vadd.f32 %v596, %v917
    %v982 = vadd.f32 %v597, %v918
    %v983 = vadd.f32 %v598, %v919
    %v984 = vadd.f32 %v599, %v920
    %v985 = vadd.f32 %v600, %v921
    %v986 = vadd.f32 %v601, %v922
    %v987 = vadd.f32 %v602, %v923
    %v988 = vadd.f32 %v603, %v924
    %989 = vset.pattern.permute.xlu0 2
    %990 = vperm.xlu0 %989, %v85
    %v991 = vpop.permute.xlu0 %990
    %993 = vset.pattern.permute.xlu0 2
    %994 = vperm.xlu0 %993, %v86
    %v995 = vpop.permute.xlu0 %994
    %997 = vset.pattern.permute.xlu0 2
    %998 = vperm.xlu0 %997, %v87
    %v999 = vpop.permute.xlu0 %998
    %1001 = vset.pattern.permute.xlu0 2
    %1002 = vperm.xlu0 %1001, %v88
    %v1003 = vpop.permute.xlu0 %1002
    %1005 = vset.pattern.permute.xlu0 2
    %1006 = vperm.xlu0 %1005, %v89
    %v1007 = vpop.permute.xlu0 %1006
    %1009 = vset.pattern.permute.xlu0 2
    %1010 = vperm.xlu0 %1009, %v90
    %v1011 = vpop.permute.xlu0 %1010
    %1013 = vset.pattern.permute.xlu0 2
    %1014 = vperm.xlu0 %1013, %v91
    %v1015 = vpop.permute.xlu0 %1014
    %1017 = vset.pattern.permute.xlu0 2
    %1018 = vperm.xlu0 %1017, %v92
    %v1019 = vpop.permute.xlu0 %1018
    %1021 = vset.pattern.permute.xlu0 2
    %1022 = vperm.xlu0 %1021, %v93
    %v1023 = vpop.permute.xlu0 %1022
    %1025 = vset.pattern.permute.xlu0 2
    %1026 = vperm.xlu0 %1025, %v94
    %v1027 = vpop.permute.xlu0 %1026
    %1029 = vset.pattern.permute.xlu0 2
    %1030 = vperm.xlu0 %1029, %v95
    %v1031 = vpop.permute.xlu0 %1030
    %1033 = vset.pattern.permute.xlu0 2
    %1034 = vperm.xlu0 %1033, %v96
    %v1035 = vpop.permute.xlu0 %1034
    %1037 = vset.pattern.permute.xlu0 2
    %1038 = vperm.xlu0 %1037, %v97
    %v1039 = vpop.permute.xlu0 %1038
    %1041 = vset.pattern.permute.xlu0 2
    %1042 = vperm.xlu0 %1041, %v98
    %v1043 = vpop.permute.xlu0 %1042
    %1045 = vset.pattern.permute.xlu0 2
    %1046 = vperm.xlu0 %1045, %v99
    %v1047 = vpop.permute.xlu0 %1046
    %1049 = vset.pattern.permute.xlu0 2
    %1050 = vperm.xlu0 %1049, %v100
    %v1051 = vpop.permute.xlu0 %1050
    %1053 = vset.pattern.permute.xlu0 2
    %1054 = vperm.xlu0 %1053, %v101
    %v1055 = vpop.permute.xlu0 %1054
    %1057 = vset.pattern.permute.xlu0 2
    %1058 = vperm.xlu0 %1057, %v102
    %v1059 = vpop.permute.xlu0 %1058
    %1061 = vset.pattern.permute.xlu0 2
    %1062 = vperm.xlu0 %1061, %v103
    %v1063 = vpop.permute.xlu0 %1062
    %1065 = vset.pattern.permute.xlu0 2
    %1066 = vperm.xlu0 %1065, %v104
    %v1067 = vpop.permute.xlu0 %1066
    %1069 = vset.pattern.permute.xlu0 2
    %1070 = vperm.xlu0 %1069, %v105
    %v1071 = vpop.permute.xlu0 %1070
    %1073 = vset.pattern.permute.xlu0 2
    %1074 = vperm.xlu0 %1073, %v106
    %v1075 = vpop.permute.xlu0 %1074
    %1077 = vset.pattern.permute.xlu0 2
    %1078 = vperm.xlu0 %1077, %v107
    %v1079 = vpop.permute.xlu0 %1078
    %1081 = vset.pattern.permute.xlu0 2
    %1082 = vperm.xlu0 %1081, %v108
    %v1083 = vpop.permute.xlu0 %1082
    %1085 = vset.pattern.permute.xlu0 2
    %1086 = vperm.xlu0 %1085, %v109
    %v1087 = vpop.permute.xlu0 %1086
    %1089 = vset.pattern.permute.xlu0 2
    %1090 = vperm.xlu0 %1089, %v110
    %v1091 = vpop.permute.xlu0 %1090
    %1093 = vset.pattern.permute.xlu0 2
    %1094 = vperm.xlu0 %1093, %v111
    %v1095 = vpop.permute.xlu0 %1094
    %1097 = vset.pattern.permute.xlu0 2
    %1098 = vperm.xlu0 %1097, %v112
    %v1099 = vpop.permute.xlu0 %1098
    %1101 = vset.pattern.permute.xlu0 2
    %1102 = vperm.xlu0 %1101, %v113
    %v1103 = vpop.permute.xlu0 %1102
    %1105 = vset.pattern.permute.xlu0 2
    %1106 = vperm.xlu0 %1105, %v114
    %v1107 = vpop.permute.xlu0 %1106
    %1109 = vset.pattern.permute.xlu0 2
    %1110 = vperm.xlu0 %1109, %v115
    %v1111 = vpop.permute.xlu0 %1110
    %1113 = vset.pattern.permute.xlu0 2
    %1114 = vperm.xlu0 %1113, %v116
    %v1115 = vpop.permute.xlu0 %1114
    %1117 = vset.pattern.permute.xlu0 2
    %1118 = vperm.xlu0 %1117, %v117
    %v1119 = vpop.permute.xlu0 %1118
    %1121 = vset.pattern.permute.xlu0 2
    %1122 = vperm.xlu0 %1121, %v118
    %v1123 = vpop.permute.xlu0 %1122
    %1125 = vset.pattern.permute.xlu0 2
    %1126 = vperm.xlu0 %1125, %v119
    %v1127 = vpop.permute.xlu0 %1126
    %1129 = vset.pattern.permute.xlu0 2
    %1130 = vperm.xlu0 %1129, %v120
    %v1131 = vpop.permute.xlu0 %1130
    %1133 = vset.pattern.permute.xlu0 2
    %1134 = vperm.xlu0 %1133, %v121
    %v1135 = vpop.permute.xlu0 %1134
    %1137 = vset.pattern.permute.xlu0 2
    %1138 = vperm.xlu0 %1137, %v122
    %v1139 = vpop.permute.xlu0 %1138
    %1141 = vset.pattern.permute.xlu0 2
    %1142 = vperm.xlu0 %1141, %v123
    %v1143 = vpop.permute.xlu0 %1142
    %1145 = vset.pattern.permute.xlu0 2
    %1146 = vperm.xlu0 %1145, %v124
    %v1147 = vpop.permute.xlu0 %1146
    %1149 = vset.pattern.permute.xlu0 2
    %1150 = vperm.xlu0 %1149, %v125
    %v1151 = vpop.permute.xlu0 %1150
    %1153 = vset.pattern.permute.xlu0 2
    %1154 = vperm.xlu0 %1153, %v126
    %v1155 = vpop.permute.xlu0 %1154
    %1157 = vset.pattern.permute.xlu0 2
    %1158 = vperm.xlu0 %1157, %v127
    %v1159 = vpop.permute.xlu0 %1158
    %1161 = vset.pattern.permute.xlu0 2
    %1162 = vperm.xlu0 %1161, %v128
    %v1163 = vpop.permute.xlu0 %1162
    %1165 = vset.pattern.permute.xlu0 2
    %1166 = vperm.xlu0 %1165, %v129
    %v1167 = vpop.permute.xlu0 %1166
    %1169 = vset.pattern.permute.xlu0 2
    %1170 = vperm.xlu0 %1169, %v130
    %v1171 = vpop.permute.xlu0 %1170
    %1173 = vset.pattern.permute.xlu0 2
    %1174 = vperm.xlu0 %1173, %v131
    %v1175 = vpop.permute.xlu0 %1174
    %1177 = vset.pattern.permute.xlu0 2
    %1178 = vperm.xlu0 %1177, %v132
    %v1179 = vpop.permute.xlu0 %1178
    %1181 = vset.pattern.permute.xlu0 2
    %1182 = vperm.xlu0 %1181, %v133
    %v1183 = vpop.permute.xlu0 %1182
    %1185 = vset.pattern.permute.xlu0 2
    %1186 = vperm.xlu0 %1185, %v134
    %v1187 = vpop.permute.xlu0 %1186
    %1189 = vset.pattern.permute.xlu0 2
    %1190 = vperm.xlu0 %1189, %v135
    %v1191 = vpop.permute.xlu0 %1190
    %1193 = vset.pattern.permute.xlu0 2
    %1194 = vperm.xlu0 %1193, %v136
    %v1195 = vpop.permute.xlu0 %1194
    %1197 = vset.pattern.permute.xlu0 2
    %1198 = vperm.xlu0 %1197, %v137
    %v1199 = vpop.permute.xlu0 %1198
    %1201 = vset.pattern.permute.xlu0 2
    %1202 = vperm.xlu0 %1201, %v138
    %v1203 = vpop.permute.xlu0 %1202
    %1205 = vset.pattern.permute.xlu0 2
    %1206 = vperm.xlu0 %1205, %v139
    %v1207 = vpop.permute.xlu0 %1206
    %1209 = vset.pattern.permute.xlu0 2
    %1210 = vperm.xlu0 %1209, %v140
    %v1211 = vpop.permute.xlu0 %1210
    %1213 = vset.pattern.permute.xlu0 2
    %1214 = vperm.xlu0 %1213, %v141
    %v1215 = vpop.permute.xlu0 %1214
    %1217 = vset.pattern.permute.xlu0 2
    %1218 = vperm.xlu0 %1217, %v142
    %v1219 = vpop.permute.xlu0 %1218
    %1221 = vset.pattern.permute.xlu0 2
    %1222 = vperm.xlu0 %1221, %v143
    %v1223 = vpop.permute.xlu0 %1222
    %1225 = vset.pattern.permute.xlu0 2
    %1226 = vperm.xlu0 %1225, %v144
    %v1227 = vpop.permute.xlu0 %1226
    %1229 = vset.pattern.permute.xlu0 2
    %1230 = vperm.xlu0 %1229, %v145
    %v1231 = vpop.permute.xlu0 %1230
    %1233 = vset.pattern.permute.xlu0 2
    %1234 = vperm.xlu0 %1233, %v146
    %v1235 = vpop.permute.xlu0 %1234
    %1237 = vset.pattern.permute.xlu0 2
    %1238 = vperm.xlu0 %1237, %v147
    %v1239 = vpop.permute.xlu0 %1238
    %1241 = vset.pattern.permute.xlu0 2
    %1242 = vperm.xlu0 %1241, %v148
    %v1243 = vpop.permute.xlu0 %1242
    %v1245 = vperm.slane %v150, 2
    %v1246 = vmul.f32 %v991, %v1245
    %v1247 = vmul.f32 %v995, %v1245
    %v1248 = vmul.f32 %v999, %v1245
    %v1249 = vmul.f32 %v1003, %v1245
    %v1250 = vmul.f32 %v1007, %v1245
    %v1251 = vmul.f32 %v1011, %v1245
    %v1252 = vmul.f32 %v1015, %v1245
    %v1253 = vmul.f32 %v1019, %v1245
    %v1254 = vmul.f32 %v1023, %v1245
    %v1255 = vmul.f32 %v1027, %v1245
    %v1256 = vmul.f32 %v1031, %v1245
    %v1257 = vmul.f32 %v1035, %v1245
    %v1258 = vmul.f32 %v1039, %v1245
    %v1259 = vmul.f32 %v1043, %v1245
    %v1260 = vmul.f32 %v1047, %v1245
    %v1261 = vmul.f32 %v1051, %v1245
    %v1262 = vmul.f32 %v1055, %v1245
    %v1263 = vmul.f32 %v1059, %v1245
    %v1264 = vmul.f32 %v1063, %v1245
    %v1265 = vmul.f32 %v1067, %v1245
    %v1266 = vmul.f32 %v1071, %v1245
    %v1267 = vmul.f32 %v1075, %v1245
    %v1268 = vmul.f32 %v1079, %v1245
    %v1269 = vmul.f32 %v1083, %v1245
    %v1270 = vmul.f32 %v1087, %v1245
    %v1271 = vmul.f32 %v1091, %v1245
    %v1272 = vmul.f32 %v1095, %v1245
    %v1273 = vmul.f32 %v1099, %v1245
    %v1274 = vmul.f32 %v1103, %v1245
    %v1275 = vmul.f32 %v1107, %v1245
    %v1276 = vmul.f32 %v1111, %v1245
    %v1277 = vmul.f32 %v1115, %v1245
    %v1278 = vmul.f32 %v1119, %v1245
    %v1279 = vmul.f32 %v1123, %v1245
    %v1280 = vmul.f32 %v1127, %v1245
    %v1281 = vmul.f32 %v1131, %v1245
    %v1282 = vmul.f32 %v1135, %v1245
    %v1283 = vmul.f32 %v1139, %v1245
    %v1284 = vmul.f32 %v1143, %v1245
    %v1285 = vmul.f32 %v1147, %v1245
    %v1286 = vmul.f32 %v1151, %v1245
    %v1287 = vmul.f32 %v1155, %v1245
    %v1288 = vmul.f32 %v1159, %v1245
    %v1289 = vmul.f32 %v1163, %v1245
    %v1290 = vmul.f32 %v1167, %v1245
    %v1291 = vmul.f32 %v1171, %v1245
    %v1292 = vmul.f32 %v1175, %v1245
    %v1293 = vmul.f32 %v1179, %v1245
    %v1294 = vmul.f32 %v1183, %v1245
    %v1295 = vmul.f32 %v1187, %v1245
    %v1296 = vmul.f32 %v1191, %v1245
    %v1297 = vmul.f32 %v1195, %v1245
    %v1298 = vmul.f32 %v1199, %v1245
    %v1299 = vmul.f32 %v1203, %v1245
    %v1300 = vmul.f32 %v1207, %v1245
    %v1301 = vmul.f32 %v1211, %v1245
    %v1302 = vmul.f32 %v1215, %v1245
    %v1303 = vmul.f32 %v1219, %v1245
    %v1304 = vmul.f32 %v1223, %v1245
    %v1305 = vmul.f32 %v1227, %v1245
    %v1306 = vmul.f32 %v1231, %v1245
    %v1307 = vmul.f32 %v1235, %v1245
    %v1308 = vmul.f32 %v1239, %v1245
    %v1309 = vmul.f32 %v1243, %v1245
    %v1310 = vadd.f32 %v925, %v1246
    %v1311 = vadd.f32 %v926, %v1247
    %v1312 = vadd.f32 %v927, %v1248
    %v1313 = vadd.f32 %v928, %v1249
    %v1314 = vadd.f32 %v929, %v1250
    %v1315 = vadd.f32 %v930, %v1251
    %v1316 = vadd.f32 %v931, %v1252
    %v1317 = vadd.f32 %v932, %v1253
    %v1318 = vadd.f32 %v933, %v1254
    %v1319 = vadd.f32 %v934, %v1255
    %v1320 = vadd.f32 %v935, %v1256
    %v1321 = vadd.f32 %v936, %v1257
    %v1322 = vadd.f32 %v937, %v1258
    %v1323 = vadd.f32 %v938, %v1259
    %v1324 = vadd.f32 %v939, %v1260
    %v1325 = vadd.f32 %v940, %v1261
    %v1326 = vadd.f32 %v941, %v1262
    %v1327 = vadd.f32 %v942, %v1263
    %v1328 = vadd.f32 %v943, %v1264
    %v1329 = vadd.f32 %v944, %v1265
    %v1330 = vadd.f32 %v945, %v1266
    %v1331 = vadd.f32 %v946, %v1267
    %v1332 = vadd.f32 %v947, %v1268
    %v1333 = vadd.f32 %v948, %v1269
    %v1334 = vadd.f32 %v949, %v1270
    %v1335 = vadd.f32 %v950, %v1271
    %v1336 = vadd.f32 %v951, %v1272
    %v1337 = vadd.f32 %v952, %v1273
    %v1338 = vadd.f32 %v953, %v1274
    %v1339 = vadd.f32 %v954, %v1275
    %v1340 = vadd.f32 %v955, %v1276
    %v1341 = vadd.f32 %v956, %v1277
    %v1342 = vadd.f32 %v957, %v1278
    %v1343 = vadd.f32 %v958, %v1279
    %v1344 = vadd.f32 %v959, %v1280
    %v1345 = vadd.f32 %v960, %v1281
    %v1346 = vadd.f32 %v961, %v1282
    %v1347 = vadd.f32 %v962, %v1283
    %v1348 = vadd.f32 %v963, %v1284
    %v1349 = vadd.f32 %v964, %v1285
    %v1350 = vadd.f32 %v965, %v1286
    %v1351 = vadd.f32 %v966, %v1287
    %v1352 = vadd.f32 %v967, %v1288
    %v1353 = vadd.f32 %v968, %v1289
    %v1354 = vadd.f32 %v969, %v1290
    %v1355 = vadd.f32 %v970, %v1291
    %v1356 = vadd.f32 %v971, %v1292
    %v1357 = vadd.f32 %v972, %v1293
    %v1358 = vadd.f32 %v973, %v1294
    %v1359 = vadd.f32 %v974, %v1295
    %v1360 = vadd.f32 %v975, %v1296
    %v1361 = vadd.f32 %v976, %v1297
    %v1362 = vadd.f32 %v977, %v1298
    %v1363 = vadd.f32 %v978, %v1299
    %v1364 = vadd.f32 %v979, %v1300
    %v1365 = vadd.f32 %v980, %v1301
    %v1366 = vadd.f32 %v981, %v1302
    %v1367 = vadd.f32 %v982, %v1303
    %v1368 = vadd.f32 %v983, %v1304
    %v1369 = vadd.f32 %v984, %v1305
    %v1370 = vadd.f32 %v985, %v1306
    %v1371 = vadd.f32 %v986, %v1307
    %v1372 = vadd.f32 %v987, %v1308
    %v1373 = vadd.f32 %v988, %v1309
    %1374 = vset.pattern.permute.xlu0 3
    %1375 = vperm.xlu0 %1374, %v85
    %v1376 = vpop.permute.xlu0 %1375
    %1378 = vset.pattern.permute.xlu0 3
    %1379 = vperm.xlu0 %1378, %v86
    %v1380 = vpop.permute.xlu0 %1379
    %1382 = vset.pattern.permute.xlu0 3
    %1383 = vperm.xlu0 %1382, %v87
    %v1384 = vpop.permute.xlu0 %1383
    %1386 = vset.pattern.permute.xlu0 3
    %1387 = vperm.xlu0 %1386, %v88
    %v1388 = vpop.permute.xlu0 %1387
    %1390 = vset.pattern.permute.xlu0 3
    %1391 = vperm.xlu0 %1390, %v89
    %v1392 = vpop.permute.xlu0 %1391
    %1394 = vset.pattern.permute.xlu0 3
    %1395 = vperm.xlu0 %1394, %v90
    %v1396 = vpop.permute.xlu0 %1395
    %1398 = vset.pattern.permute.xlu0 3
    %1399 = vperm.xlu0 %1398, %v91
    %v1400 = vpop.permute.xlu0 %1399
    %1402 = vset.pattern.permute.xlu0 3
    %1403 = vperm.xlu0 %1402, %v92
    %v1404 = vpop.permute.xlu0 %1403
    %1406 = vset.pattern.permute.xlu0 3
    %1407 = vperm.xlu0 %1406, %v93
    %v1408 = vpop.permute.xlu0 %1407
    %1410 = vset.pattern.permute.xlu0 3
    %1411 = vperm.xlu0 %1410, %v94
    %v1412 = vpop.permute.xlu0 %1411
    %1414 = vset.pattern.permute.xlu0 3
    %1415 = vperm.xlu0 %1414, %v95
    %v1416 = vpop.permute.xlu0 %1415
    %1418 = vset.pattern.permute.xlu0 3
    %1419 = vperm.xlu0 %1418, %v96
    %v1420 = vpop.permute.xlu0 %1419
    %1422 = vset.pattern.permute.xlu0 3
    %1423 = vperm.xlu0 %1422, %v97
    %v1424 = vpop.permute.xlu0 %1423
    %1426 = vset.pattern.permute.xlu0 3
    %1427 = vperm.xlu0 %1426, %v98
    %v1428 = vpop.permute.xlu0 %1427
    %1430 = vset.pattern.permute.xlu0 3
    %1431 = vperm.xlu0 %1430, %v99
    %v1432 = vpop.permute.xlu0 %1431
    %1434 = vset.pattern.permute.xlu0 3
    %1435 = vperm.xlu0 %1434, %v100
    %v1436 = vpop.permute.xlu0 %1435
    %1438 = vset.pattern.permute.xlu0 3
    %1439 = vperm.xlu0 %1438, %v101
    %v1440 = vpop.permute.xlu0 %1439
    %1442 = vset.pattern.permute.xlu0 3
    %1443 = vperm.xlu0 %1442, %v102
    %v1444 = vpop.permute.xlu0 %1443
    %1446 = vset.pattern.permute.xlu0 3
    %1447 = vperm.xlu0 %1446, %v103
    %v1448 = vpop.permute.xlu0 %1447
    %1450 = vset.pattern.permute.xlu0 3
    %1451 = vperm.xlu0 %1450, %v104
    %v1452 = vpop.permute.xlu0 %1451
    %1454 = vset.pattern.permute.xlu0 3
    %1455 = vperm.xlu0 %1454, %v105
    %v1456 = vpop.permute.xlu0 %1455
    %1458 = vset.pattern.permute.xlu0 3
    %1459 = vperm.xlu0 %1458, %v106
    %v1460 = vpop.permute.xlu0 %1459
    %1462 = vset.pattern.permute.xlu0 3
    %1463 = vperm.xlu0 %1462, %v107
    %v1464 = vpop.permute.xlu0 %1463
    %1466 = vset.pattern.permute.xlu0 3
    %1467 = vperm.xlu0 %1466, %v108
    %v1468 = vpop.permute.xlu0 %1467
    %1470 = vset.pattern.permute.xlu0 3
    %1471 = vperm.xlu0 %1470, %v109
    %v1472 = vpop.permute.xlu0 %1471
    %1474 = vset.pattern.permute.xlu0 3
    %1475 = vperm.xlu0 %1474, %v110
    %v1476 = vpop.permute.xlu0 %1475
    %1478 = vset.pattern.permute.xlu0 3
    %1479 = vperm.xlu0 %1478, %v111
    %v1480 = vpop.permute.xlu0 %1479
    %1482 = vset.pattern.permute.xlu0 3
    %1483 = vperm.xlu0 %1482, %v112
    %v1484 = vpop.permute.xlu0 %1483
    %1486 = vset.pattern.permute.xlu0 3
    %1487 = vperm.xlu0 %1486, %v113
    %v1488 = vpop.permute.xlu0 %1487
    %1490 = vset.pattern.permute.xlu0 3
    %1491 = vperm.xlu0 %1490, %v114
    %v1492 = vpop.permute.xlu0 %1491
    %1494 = vset.pattern.permute.xlu0 3
    %1495 = vperm.xlu0 %1494, %v115
    %v1496 = vpop.permute.xlu0 %1495
    %1498 = vset.pattern.permute.xlu0 3
    %1499 = vperm.xlu0 %1498, %v116
    %v1500 = vpop.permute.xlu0 %1499
    %1502 = vset.pattern.permute.xlu0 3
    %1503 = vperm.xlu0 %1502, %v117
    %v1504 = vpop.permute.xlu0 %1503
    %1506 = vset.pattern.permute.xlu0 3
    %1507 = vperm.xlu0 %1506, %v118
    %v1508 = vpop.permute.xlu0 %1507
    %1510 = vset.pattern.permute.xlu0 3
    %1511 = vperm.xlu0 %1510, %v119
    %v1512 = vpop.permute.xlu0 %1511
    %1514 = vset.pattern.permute.xlu0 3
    %1515 = vperm.xlu0 %1514, %v120
    %v1516 = vpop.permute.xlu0 %1515
    %1518 = vset.pattern.permute.xlu0 3
    %1519 = vperm.xlu0 %1518, %v121
    %v1520 = vpop.permute.xlu0 %1519
    %1522 = vset.pattern.permute.xlu0 3
    %1523 = vperm.xlu0 %1522, %v122
    %v1524 = vpop.permute.xlu0 %1523
    %1526 = vset.pattern.permute.xlu0 3
    %1527 = vperm.xlu0 %1526, %v123
    %v1528 = vpop.permute.xlu0 %1527
    %1530 = vset.pattern.permute.xlu0 3
    %1531 = vperm.xlu0 %1530, %v124
    %v1532 = vpop.permute.xlu0 %1531
    %1534 = vset.pattern.permute.xlu0 3
    %1535 = vperm.xlu0 %1534, %v125
    %v1536 = vpop.permute.xlu0 %1535
    %1538 = vset.pattern.permute.xlu0 3
    %1539 = vperm.xlu0 %1538, %v126
    %v1540 = vpop.permute.xlu0 %1539
    %1542 = vset.pattern.permute.xlu0 3
    %1543 = vperm.xlu0 %1542, %v127
    %v1544 = vpop.permute.xlu0 %1543
    %1546 = vset.pattern.permute.xlu0 3
    %1547 = vperm.xlu0 %1546, %v128
    %v1548 = vpop.permute.xlu0 %1547
    %1550 = vset.pattern.permute.xlu0 3
    %1551 = vperm.xlu0 %1550, %v129
    %v1552 = vpop.permute.xlu0 %1551
    %1554 = vset.pattern.permute.xlu0 3
    %1555 = vperm.xlu0 %1554, %v130
    %v1556 = vpop.permute.xlu0 %1555
    %1558 = vset.pattern.permute.xlu0 3
    %1559 = vperm.xlu0 %1558, %v131
    %v1560 = vpop.permute.xlu0 %1559
    %1562 = vset.pattern.permute.xlu0 3
    %1563 = vperm.xlu0 %1562, %v132
    %v1564 = vpop.permute.xlu0 %1563
    %1566 = vset.pattern.permute.xlu0 3
    %1567 = vperm.xlu0 %1566, %v133
    %v1568 = vpop.permute.xlu0 %1567
    %1570 = vset.pattern.permute.xlu0 3
    %1571 = vperm.xlu0 %1570, %v134
    %v1572 = vpop.permute.xlu0 %1571
    %1574 = vset.pattern.permute.xlu0 3
    %1575 = vperm.xlu0 %1574, %v135
    %v1576 = vpop.permute.xlu0 %1575
    %1578 = vset.pattern.permute.xlu0 3
    %1579 = vperm.xlu0 %1578, %v136
    %v1580 = vpop.permute.xlu0 %1579
    %1582 = vset.pattern.permute.xlu0 3
    %1583 = vperm.xlu0 %1582, %v137
    %v1584 = vpop.permute.xlu0 %1583
    %1586 = vset.pattern.permute.xlu0 3
    %1587 = vperm.xlu0 %1586, %v138
    %v1588 = vpop.permute.xlu0 %1587
    %1590 = vset.pattern.permute.xlu0 3
    %1591 = vperm.xlu0 %1590, %v139
    %v1592 = vpop.permute.xlu0 %1591
    %1594 = vset.pattern.permute.xlu0 3
    %1595 = vperm.xlu0 %1594, %v140
    %v1596 = vpop.permute.xlu0 %1595
    %1598 = vset.pattern.permute.xlu0 3
    %1599 = vperm.xlu0 %1598, %v141
    %v1600 = vpop.permute.xlu0 %1599
    %1602 = vset.pattern.permute.xlu0 3
    %1603 = vperm.xlu0 %1602, %v142
    %v1604 = vpop.permute.xlu0 %1603
    %1606 = vset.pattern.permute.xlu0 3
    %1607 = vperm.xlu0 %1606, %v143
    %v1608 = vpop.permute.xlu0 %1607
    %1610 = vset.pattern.permute.xlu0 3
    %1611 = vperm.xlu0 %1610, %v144
    %v1612 = vpop.permute.xlu0 %1611
    %1614 = vset.pattern.permute.xlu0 3
    %1615 = vperm.xlu0 %1614, %v145
    %v1616 = vpop.permute.xlu0 %1615
    %1618 = vset.pattern.permute.xlu0 3
    %1619 = vperm.xlu0 %1618, %v146
    %v1620 = vpop.permute.xlu0 %1619
    %1622 = vset.pattern.permute.xlu0 3
    %1623 = vperm.xlu0 %1622, %v147
    %v1624 = vpop.permute.xlu0 %1623
    %1626 = vset.pattern.permute.xlu0 3
    %1627 = vperm.xlu0 %1626, %v148
    %v1628 = vpop.permute.xlu0 %1627
    %v1630 = vperm.slane %v150, 3
    %v1631 = vmul.f32 %v1376, %v1630
    %v1632 = vmul.f32 %v1380, %v1630
    %v1633 = vmul.f32 %v1384, %v1630
    %v1634 = vmul.f32 %v1388, %v1630
    %v1635 = vmul.f32 %v1392, %v1630
    %v1636 = vmul.f32 %v1396, %v1630
    %v1637 = vmul.f32 %v1400, %v1630
    %v1638 = vmul.f32 %v1404, %v1630
    %v1639 = vmul.f32 %v1408, %v1630
    %v1640 = vmul.f32 %v1412, %v1630
    %v1641 = vmul.f32 %v1416, %v1630
    %v1642 = vmul.f32 %v1420, %v1630
    %v1643 = vmul.f32 %v1424, %v1630
    %v1644 = vmul.f32 %v1428, %v1630
    %v1645 = vmul.f32 %v1432, %v1630
    %v1646 = vmul.f32 %v1436, %v1630
    %v1647 = vmul.f32 %v1440, %v1630
    %v1648 = vmul.f32 %v1444, %v1630
    %v1649 = vmul.f32 %v1448, %v1630
    %v1650 = vmul.f32 %v1452, %v1630
    %v1651 = vmul.f32 %v1456, %v1630
    %v1652 = vmul.f32 %v1460, %v1630
    %v1653 = vmul.f32 %v1464, %v1630
    %v1654 = vmul.f32 %v1468, %v1630
    %v1655 = vmul.f32 %v1472, %v1630
    %v1656 = vmul.f32 %v1476, %v1630
    %v1657 = vmul.f32 %v1480, %v1630
    %v1658 = vmul.f32 %v1484, %v1630
    %v1659 = vmul.f32 %v1488, %v1630
    %v1660 = vmul.f32 %v1492, %v1630
    %v1661 = vmul.f32 %v1496, %v1630
    %v1662 = vmul.f32 %v1500, %v1630
    %v1663 = vmul.f32 %v1504, %v1630
    %v1664 = vmul.f32 %v1508, %v1630
    %v1665 = vmul.f32 %v1512, %v1630
    %v1666 = vmul.f32 %v1516, %v1630
    %v1667 = vmul.f32 %v1520, %v1630
    %v1668 = vmul.f32 %v1524, %v1630
    %v1669 = vmul.f32 %v1528, %v1630
    %v1670 = vmul.f32 %v1532, %v1630
    %v1671 = vmul.f32 %v1536, %v1630
    %v1672 = vmul.f32 %v1540, %v1630
    %v1673 = vmul.f32 %v1544, %v1630
    %v1674 = vmul.f32 %v1548, %v1630
    %v1675 = vmul.f32 %v1552, %v1630
    %v1676 = vmul.f32 %v1556, %v1630
    %v1677 = vmul.f32 %v1560, %v1630
    %v1678 = vmul.f32 %v1564, %v1630
    %v1679 = vmul.f32 %v1568, %v1630
    %v1680 = vmul.f32 %v1572, %v1630
    %v1681 = vmul.f32 %v1576, %v1630
    %v1682 = vmul.f32 %v1580, %v1630
    %v1683 = vmul.f32 %v1584, %v1630
    %v1684 = vmul.f32 %v1588, %v1630
    %v1685 = vmul.f32 %v1592, %v1630
    %v1686 = vmul.f32 %v1596, %v1630
    %v1687 = vmul.f32 %v1600, %v1630
    %v1688 = vmul.f32 %v1604, %v1630
    %v1689 = vmul.f32 %v1608, %v1630
    %v1690 = vmul.f32 %v1612, %v1630
    %v1691 = vmul.f32 %v1616, %v1630
    %v1692 = vmul.f32 %v1620, %v1630
    %v1693 = vmul.f32 %v1624, %v1630
    %v1694 = vmul.f32 %v1628, %v1630
    %v1695 = vadd.f32 %v1310, %v1631
    %v1696 = vadd.f32 %v1311, %v1632
    %v1697 = vadd.f32 %v1312, %v1633
    %v1698 = vadd.f32 %v1313, %v1634
    %v1699 = vadd.f32 %v1314, %v1635
    %v1700 = vadd.f32 %v1315, %v1636
    %v1701 = vadd.f32 %v1316, %v1637
    %v1702 = vadd.f32 %v1317, %v1638
    %v1703 = vadd.f32 %v1318, %v1639
    %v1704 = vadd.f32 %v1319, %v1640
    %v1705 = vadd.f32 %v1320, %v1641
    %v1706 = vadd.f32 %v1321, %v1642
    %v1707 = vadd.f32 %v1322, %v1643
    %v1708 = vadd.f32 %v1323, %v1644
    %v1709 = vadd.f32 %v1324, %v1645
    %v1710 = vadd.f32 %v1325, %v1646
    %v1711 = vadd.f32 %v1326, %v1647
    %v1712 = vadd.f32 %v1327, %v1648
    %v1713 = vadd.f32 %v1328, %v1649
    %v1714 = vadd.f32 %v1329, %v1650
    %v1715 = vadd.f32 %v1330, %v1651
    %v1716 = vadd.f32 %v1331, %v1652
    %v1717 = vadd.f32 %v1332, %v1653
    %v1718 = vadd.f32 %v1333, %v1654
    %v1719 = vadd.f32 %v1334, %v1655
    %v1720 = vadd.f32 %v1335, %v1656
    %v1721 = vadd.f32 %v1336, %v1657
    %v1722 = vadd.f32 %v1337, %v1658
    %v1723 = vadd.f32 %v1338, %v1659
    %v1724 = vadd.f32 %v1339, %v1660
    %v1725 = vadd.f32 %v1340, %v1661
    %v1726 = vadd.f32 %v1341, %v1662
    %v1727 = vadd.f32 %v1342, %v1663
    %v1728 = vadd.f32 %v1343, %v1664
    %v1729 = vadd.f32 %v1344, %v1665
    %v1730 = vadd.f32 %v1345, %v1666
    %v1731 = vadd.f32 %v1346, %v1667
    %v1732 = vadd.f32 %v1347, %v1668
    %v1733 = vadd.f32 %v1348, %v1669
    %v1734 = vadd.f32 %v1349, %v1670
    %v1735 = vadd.f32 %v1350, %v1671
    %v1736 = vadd.f32 %v1351, %v1672
    %v1737 = vadd.f32 %v1352, %v1673
    %v1738 = vadd.f32 %v1353, %v1674
    %v1739 = vadd.f32 %v1354, %v1675
    %v1740 = vadd.f32 %v1355, %v1676
    %v1741 = vadd.f32 %v1356, %v1677
    %v1742 = vadd.f32 %v1357, %v1678
    %v1743 = vadd.f32 %v1358, %v1679
    %v1744 = vadd.f32 %v1359, %v1680
    %v1745 = vadd.f32 %v1360, %v1681
    %v1746 = vadd.f32 %v1361, %v1682
    %v1747 = vadd.f32 %v1362, %v1683
    %v1748 = vadd.f32 %v1363, %v1684
    %v1749 = vadd.f32 %v1364, %v1685
    %v1750 = vadd.f32 %v1365, %v1686
    %v1751 = vadd.f32 %v1366, %v1687
    %v1752 = vadd.f32 %v1367, %v1688
    %v1753 = vadd.f32 %v1368, %v1689
    %v1754 = vadd.f32 %v1369, %v1690
    %v1755 = vadd.f32 %v1370, %v1691
    %v1756 = vadd.f32 %v1371, %v1692
    %v1757 = vadd.f32 %v1372, %v1693
    %v1758 = vadd.f32 %v1373, %v1694
    %v1759 = vmax.f32 %v1695, 0.0
    %v1760 = vmax.f32 %v1696, 0.0
    %v1761 = vmax.f32 %v1697, 0.0
    %v1762 = vmax.f32 %v1698, 0.0
    %v1763 = vmax.f32 %v1699, 0.0
    %v1764 = vmax.f32 %v1700, 0.0
    %v1765 = vmax.f32 %v1701, 0.0
    %v1766 = vmax.f32 %v1702, 0.0
    %v1767 = vmax.f32 %v1703, 0.0
    %v1768 = vmax.f32 %v1704, 0.0
    %v1769 = vmax.f32 %v1705, 0.0
    %v1770 = vmax.f32 %v1706, 0.0
    %v1771 = vmax.f32 %v1707, 0.0
    %v1772 = vmax.f32 %v1708, 0.0
    %v1773 = vmax.f32 %v1709, 0.0
    %v1774 = vmax.f32 %v1710, 0.0
    %v1775 = vmax.f32 %v1711, 0.0
    %v1776 = vmax.f32 %v1712, 0.0
    %v1777 = vmax.f32 %v1713, 0.0
    %v1778 = vmax.f32 %v1714, 0.0
    %v1779 = vmax.f32 %v1715, 0.0
    %v1780 = vmax.f32 %v1716, 0.0
    %v1781 = vmax.f32 %v1717, 0.0
    %v1782 = vmax.f32 %v1718, 0.0
    %v1783 = vmax.f32 %v1719, 0.0
    %v1784 = vmax.f32 %v1720, 0.0
    %v1785 = vmax.f32 %v1721, 0.0
    %v1786 = vmax.f32 %v1722, 0.0
    %v1787 = vmax.f32 %v1723, 0.0
    %v1788 = vmax.f32 %v1724, 0.0
    %v1789 = vmax.f32 %v1725, 0.0
    %v1790 = vmax.f32 %v1726, 0.0
    %v1791 = vmax.f32 %v1727, 0.0
    %v1792 = vmax.f32 %v1728, 0.0
    %v1793 = vmax.f32 %v1729, 0.0
    %v1794 = vmax.f32 %v1730, 0.0
    %v1795 = vmax.f32 %v1731, 0.0
    %v1796 = vmax.f32 %v1732, 0.0
    %v1797 = vmax.f32 %v1733, 0.0
    %v1798 = vmax.f32 %v1734, 0.0
    %v1799 = vmax.f32 %v1735, 0.0
    %v1800 = vmax.f32 %v1736, 0.0
    %v1801 = vmax.f32 %v1737, 0.0
    %v1802 = vmax.f32 %v1738, 0.0
    %v1803 = vmax.f32 %v1739, 0.0
    %v1804 = vmax.f32 %v1740, 0.0
    %v1805 = vmax.f32 %v1741, 0.0
    %v1806 = vmax.f32 %v1742, 0.0
    %v1807 = vmax.f32 %v1743, 0.0
    %v1808 = vmax.f32 %v1744, 0.0
    %v1809 = vmax.f32 %v1745, 0.0
    %v1810 = vmax.f32 %v1746, 0.0
    %v1811 = vmax.f32 %v1747, 0.0
    %v1812 = vmax.f32 %v1748, 0.0
    %v1813 = vmax.f32 %v1749, 0.0
    %v1814 = vmax.f32 %v1750, 0.0
    %v1815 = vmax.f32 %v1751, 0.0
    %v1816 = vmax.f32 %v1752, 0.0
    %v1817 = vmax.f32 %v1753, 0.0
    %v1818 = vmax.f32 %v1754, 0.0
    %v1819 = vmax.f32 %v1755, 0.0
    %v1820 = vmax.f32 %v1756, 0.0
    %v1821 = vmax.f32 %v1757, 0.0
    %v1822 = vmax.f32 %v1758, 0.0
    %v1823 = vpack.c.bf16 %v1760, %v1759
    %v1824 = vpack.c.bf16 %v1762, %v1761
    %v1825 = vpack.c.bf16 %v1764, %v1763
    %v1826 = vpack.c.bf16 %v1766, %v1765
    %v1827 = vpack.c.bf16 %v1768, %v1767
    %v1828 = vpack.c.bf16 %v1770, %v1769
    %v1829 = vpack.c.bf16 %v1772, %v1771
    %v1830 = vpack.c.bf16 %v1774, %v1773
    %v1831 = vpack.c.bf16 %v1776, %v1775
    %v1832 = vpack.c.bf16 %v1778, %v1777
    %v1833 = vpack.c.bf16 %v1780, %v1779
    %v1834 = vpack.c.bf16 %v1782, %v1781
    %v1835 = vpack.c.bf16 %v1784, %v1783
    %v1836 = vpack.c.bf16 %v1786, %v1785
    %v1837 = vpack.c.bf16 %v1788, %v1787
    %v1838 = vpack.c.bf16 %v1790, %v1789
    %v1839 = vpack.c.bf16 %v1792, %v1791
    %v1840 = vpack.c.bf16 %v1794, %v1793
    %v1841 = vpack.c.bf16 %v1796, %v1795
    %v1842 = vpack.c.bf16 %v1798, %v1797
    %v1843 = vpack.c.bf16 %v1800, %v1799
    %v1844 = vpack.c.bf16 %v1802, %v1801
    %v1845 = vpack.c.bf16 %v1804, %v1803
    %v1846 = vpack.c.bf16 %v1806, %v1805
    %v1847 = vpack.c.bf16 %v1808, %v1807
    %v1848 = vpack.c.bf16 %v1810, %v1809
    %v1849 = vpack.c.bf16 %v1812, %v1811
    %v1850 = vpack.c.bf16 %v1814, %v1813
    %v1851 = vpack.c.bf16 %v1816, %v1815
    %v1852 = vpack.c.bf16 %v1818, %v1817
    %v1853 = vpack.c.bf16 %v1820, %v1819
    %v1854 = vpack.c.bf16 %v1822, %v1821
    %v1855 = vld [vmem:[%s3] sm:$0xf]
    %v1856 = vld [vmem:[%s3 + $0x4] sm:$0xf]
    %v1857 = vld [vmem:[%s3 + $0x8] sm:$0xf]
    %v1858 = vld [vmem:[%s3 + $0xc] sm:$0xf]
    %v1859 = vld [vmem:[%s3 + $0x10] sm:$0xf]
    %v1860 = vld [vmem:[%s3 + $0x14] sm:$0xf]
    %v1861 = vld [vmem:[%s3 + $0x18] sm:$0xf]
    %v1862 = vld [vmem:[%s3 + $0x1c] sm:$0xf]
    %v1863 = vld [vmem:[%s3 + $0x20] sm:$0xf]
    %v1864 = vld [vmem:[%s3 + $0x24] sm:$0xf]
    %v1865 = vld [vmem:[%s3 + $0x28] sm:$0xf]
    %v1866 = vld [vmem:[%s3 + $0x2c] sm:$0xf]
    %v1867 = vld [vmem:[%s3 + $0x30] sm:$0xf]
    %v1868 = vld [vmem:[%s3 + $0x34] sm:$0xf]
    %v1869 = vld [vmem:[%s3 + $0x38] sm:$0xf]
    %v1870 = vld [vmem:[%s3 + $0x3c] sm:$0xf]
    %v1871 = vld [vmem:[%s4] sm:$0x1]
    %v1873 = vperm.slane %v1871, 0
    %v1891 = vunpack.c.l.b16 %v1855
    %v1892 = vunpack.c.l.b16 %v1856
    %v1893 = vunpack.c.l.b16 %v1857
    %v1894 = vunpack.c.l.b16 %v1858
    %v1895 = vunpack.c.l.b16 %v1859
    %v1896 = vunpack.c.l.b16 %v1860
    %v1897 = vunpack.c.l.b16 %v1861
    %v1898 = vunpack.c.l.b16 %v1862
    %v1899 = vunpack.c.l.b16 %v1863
    %v1900 = vunpack.c.l.b16 %v1864
    %v1901 = vunpack.c.l.b16 %v1865
    %v1902 = vunpack.c.l.b16 %v1866
    %v1903 = vunpack.c.l.b16 %v1867
    %v1904 = vunpack.c.l.b16 %v1868
    %v1905 = vunpack.c.l.b16 %v1869
    %v1906 = vunpack.c.l.b16 %v1870
    %v1907 = vpack.c.b16 %v1892, %v1891
    %v1908 = vpack.c.b16 %v1894, %v1893
    %v1909 = vpack.c.b16 %v1896, %v1895
    %v1910 = vpack.c.b16 %v1898, %v1897
    %v1911 = vpack.c.b16 %v1900, %v1899
    %v1912 = vpack.c.b16 %v1902, %v1901
    %v1913 = vpack.c.b16 %v1904, %v1903
    %v1914 = vpack.c.b16 %v1906, %v1905
    %1923 = vmatpush.bf16.msra.mxu0 %v1914
    %1924 = vmatpush.bf16.msra.mxu0 %v1913
    %1925 = vmatpush.bf16.msra.mxu0 %v1912
    %1926 = vmatpush.bf16.msra.mxu0 %v1911
    %1927 = vmatpush.bf16.msra.mxu0 %v1910
    %1928 = vmatpush.bf16.msra.mxu0 %v1909
    %1929 = vmatpush.bf16.msra.mxu0 %v1908
    %1930 = vmatpush.bf16.msra.mxu0 %v1907
    %1931 = vmatmul.bf16.gmra.mxu0 %v1823
    %v1932 = vpop.f32.mrf.mxu0
    %v1933 = vadd.f32 %v1873, %v1932
    %v1934 = vpop.f32.mrf.mxu0
    %v1935 = vadd.f32 %v1873, %v1934
    %1936 = vmatmul.bf16.gmra.mxu0 %v1824
    %v1937 = vpop.f32.mrf.mxu0
    %v1938 = vadd.f32 %v1873, %v1937
    %v1939 = vpop.f32.mrf.mxu0
    %v1940 = vadd.f32 %v1873, %v1939
    %1941 = vmatmul.bf16.gmra.mxu0 %v1825
    %v1942 = vpop.f32.mrf.mxu0
    %v1943 = vadd.f32 %v1873, %v1942
    %v1944 = vpop.f32.mrf.mxu0
    %v1945 = vadd.f32 %v1873, %v1944
    %1946 = vmatmul.bf16.gmra.mxu0 %v1826
    %v1947 = vpop.f32.mrf.mxu0
    %v1948 = vadd.f32 %v1873, %v1947
    %v1949 = vpop.f32.mrf.mxu0
    %v1950 = vadd.f32 %v1873, %v1949
    %1951 = vmatmul.bf16.gmra.mxu0 %v1827
    %v1952 = vpop.f32.mrf.mxu0
    %v1953 = vadd.f32 %v1873, %v1952
    %v1954 = vpop.f32.mrf.mxu0
    %v1955 = vadd.f32 %v1873, %v1954
    %1956 = vmatmul.bf16.gmra.mxu0 %v1828
    %v1957 = vpop.f32.mrf.mxu0
    %v1958 = vadd.f32 %v1873, %v1957
    %v1959 = vpop.f32.mrf.mxu0
    %v1960 = vadd.f32 %v1873, %v1959
    %1961 = vmatmul.bf16.gmra.mxu0 %v1829
    %v1962 = vpop.f32.mrf.mxu0
    %v1963 = vadd.f32 %v1873, %v1962
    %v1964 = vpop.f32.mrf.mxu0
    %v1965 = vadd.f32 %v1873, %v1964
    %1966 = vmatmul.bf16.gmra.mxu0 %v1830
    %v1967 = vpop.f32.mrf.mxu0
    %v1968 = vadd.f32 %v1873, %v1967
    %v1969 = vpop.f32.mrf.mxu0
    %v1970 = vadd.f32 %v1873, %v1969
    %1971 = vmatmul.bf16.gmra.mxu0 %v1831
    %v1972 = vpop.f32.mrf.mxu0
    %v1973 = vadd.f32 %v1873, %v1972
    %v1974 = vpop.f32.mrf.mxu0
    %v1975 = vadd.f32 %v1873, %v1974
    %1976 = vmatmul.bf16.gmra.mxu0 %v1832
    %v1977 = vpop.f32.mrf.mxu0
    %v1978 = vadd.f32 %v1873, %v1977
    %v1979 = vpop.f32.mrf.mxu0
    %v1980 = vadd.f32 %v1873, %v1979
    %1981 = vmatmul.bf16.gmra.mxu0 %v1833
    %v1982 = vpop.f32.mrf.mxu0
    %v1983 = vadd.f32 %v1873, %v1982
    %v1984 = vpop.f32.mrf.mxu0
    %v1985 = vadd.f32 %v1873, %v1984
    %1986 = vmatmul.bf16.gmra.mxu0 %v1834
    %v1987 = vpop.f32.mrf.mxu0
    %v1988 = vadd.f32 %v1873, %v1987
    %v1989 = vpop.f32.mrf.mxu0
    %v1990 = vadd.f32 %v1873, %v1989
    %1991 = vmatmul.bf16.gmra.mxu0 %v1835
    %v1992 = vpop.f32.mrf.mxu0
    %v1993 = vadd.f32 %v1873, %v1992
    %v1994 = vpop.f32.mrf.mxu0
    %v1995 = vadd.f32 %v1873, %v1994
    %1996 = vmatmul.bf16.gmra.mxu0 %v1836
    %v1997 = vpop.f32.mrf.mxu0
    %v1998 = vadd.f32 %v1873, %v1997
    %v1999 = vpop.f32.mrf.mxu0
    %v2000 = vadd.f32 %v1873, %v1999
    %2001 = vmatmul.bf16.gmra.mxu0 %v1837
    %v2002 = vpop.f32.mrf.mxu0
    %v2003 = vadd.f32 %v1873, %v2002
    %v2004 = vpop.f32.mrf.mxu0
    %v2005 = vadd.f32 %v1873, %v2004
    %2006 = vmatmul.bf16.gmra.mxu0 %v1838
    %v2007 = vpop.f32.mrf.mxu0
    %v2008 = vadd.f32 %v1873, %v2007
    %v2009 = vpop.f32.mrf.mxu0
    %v2010 = vadd.f32 %v1873, %v2009
    %2011 = vmatmul.bf16.gmra.mxu0 %v1839
    %v2012 = vpop.f32.mrf.mxu0
    %v2013 = vadd.f32 %v1873, %v2012
    %v2014 = vpop.f32.mrf.mxu0
    %v2015 = vadd.f32 %v1873, %v2014
    %2016 = vmatmul.bf16.gmra.mxu0 %v1840
    %v2017 = vpop.f32.mrf.mxu0
    %v2018 = vadd.f32 %v1873, %v2017
    %v2019 = vpop.f32.mrf.mxu0
    %v2020 = vadd.f32 %v1873, %v2019
    %2021 = vmatmul.bf16.gmra.mxu0 %v1841
    %v2022 = vpop.f32.mrf.mxu0
    %v2023 = vadd.f32 %v1873, %v2022
    %v2024 = vpop.f32.mrf.mxu0
    %v2025 = vadd.f32 %v1873, %v2024
    %2026 = vmatmul.bf16.gmra.mxu0 %v1842
    %v2027 = vpop.f32.mrf.mxu0
    %v2028 = vadd.f32 %v1873, %v2027
    %v2029 = vpop.f32.mrf.mxu0
    %v2030 = vadd.f32 %v1873, %v2029
    %2031 = vmatmul.bf16.gmra.mxu0 %v1843
    %v2032 = vpop.f32.mrf.mxu0
    %v2033 = vadd.f32 %v1873, %v2032
    %v2034 = vpop.f32.mrf.mxu0
    %v2035 = vadd.f32 %v1873, %v2034
    %2036 = vmatmul.bf16.gmra.mxu0 %v1844
    %v2037 = vpop.f32.mrf.mxu0
    %v2038 = vadd.f32 %v1873, %v2037
    %v2039 = vpop.f32.mrf.mxu0
    %v2040 = vadd.f32 %v1873, %v2039
    %2041 = vmatmul.bf16.gmra.mxu0 %v1845
    %v2042 = vpop.f32.mrf.mxu0
    %v2043 = vadd.f32 %v1873, %v2042
    %v2044 = vpop.f32.mrf.mxu0
    %v2045 = vadd.f32 %v1873, %v2044
    %2046 = vmatmul.bf16.gmra.mxu0 %v1846
    %v2047 = vpop.f32.mrf.mxu0
    %v2048 = vadd.f32 %v1873, %v2047
    %v2049 = vpop.f32.mrf.mxu0
    %v2050 = vadd.f32 %v1873, %v2049
    %2051 = vmatmul.bf16.gmra.mxu0 %v1847
    %v2052 = vpop.f32.mrf.mxu0
    %v2053 = vadd.f32 %v1873, %v2052
    %v2054 = vpop.f32.mrf.mxu0
    %v2055 = vadd.f32 %v1873, %v2054
    %2056 = vmatmul.bf16.gmra.mxu0 %v1848
    %v2057 = vpop.f32.mrf.mxu0
    %v2058 = vadd.f32 %v1873, %v2057
    %v2059 = vpop.f32.mrf.mxu0
    %v2060 = vadd.f32 %v1873, %v2059
    %2061 = vmatmul.bf16.gmra.mxu0 %v1849
    %v2062 = vpop.f32.mrf.mxu0
    %v2063 = vadd.f32 %v1873, %v2062
    %v2064 = vpop.f32.mrf.mxu0
    %v2065 = vadd.f32 %v1873, %v2064
    %2066 = vmatmul.bf16.gmra.mxu0 %v1850
    %v2067 = vpop.f32.mrf.mxu0
    %v2068 = vadd.f32 %v1873, %v2067
    %v2069 = vpop.f32.mrf.mxu0
    %v2070 = vadd.f32 %v1873, %v2069
    %2071 = vmatmul.bf16.gmra.mxu0 %v1851
    %v2072 = vpop.f32.mrf.mxu0
    %v2073 = vadd.f32 %v1873, %v2072
    %v2074 = vpop.f32.mrf.mxu0
    %v2075 = vadd.f32 %v1873, %v2074
    %2076 = vmatmul.bf16.gmra.mxu0 %v1852
    %v2077 = vpop.f32.mrf.mxu0
    %v2078 = vadd.f32 %v1873, %v2077
    %v2079 = vpop.f32.mrf.mxu0
    %v2080 = vadd.f32 %v1873, %v2079
    %2081 = vmatmul.bf16.gmra.mxu0 %v1853
    %v2082 = vpop.f32.mrf.mxu0
    %v2083 = vadd.f32 %v1873, %v2082
    %v2084 = vpop.f32.mrf.mxu0
    %v2085 = vadd.f32 %v1873, %v2084
    %2086 = vmatmul.bf16.gmra.mxu0 %v1854
    %v2087 = vpop.f32.mrf.mxu0
    %v2088 = vadd.f32 %v1873, %v2087
    %v2089 = vpop.f32.mrf.mxu0
    %v2090 = vadd.f32 %v1873, %v2089
    %2091 = vdwg.mxu0
    %v2092 = vpack.c.bf16 %v1933, %v1933
    %v2093 = vpack.c.bf16 %v1935, %v1935
    %v2094 = vpack.c.bf16 %v1938, %v1938
    %v2095 = vpack.c.bf16 %v1940, %v1940
    %v2096 = vpack.c.bf16 %v1943, %v1943
    %v2097 = vpack.c.bf16 %v1945, %v1945
    %v2098 = vpack.c.bf16 %v1948, %v1948
    %v2099 = vpack.c.bf16 %v1950, %v1950
    %v2100 = vpack.c.bf16 %v1953, %v1953
    %v2101 = vpack.c.bf16 %v1955, %v1955
    %v2102 = vpack.c.bf16 %v1958, %v1958
    %v2103 = vpack.c.bf16 %v1960, %v1960
    %v2104 = vpack.c.bf16 %v1963, %v1963
    %v2105 = vpack.c.bf16 %v1965, %v1965
    %v2106 = vpack.c.bf16 %v1968, %v1968
    %v2107 = vpack.c.bf16 %v1970, %v1970
    %v2108 = vpack.c.bf16 %v1973, %v1973
    %v2109 = vpack.c.bf16 %v1975, %v1975
    %v2110 = vpack.c.bf16 %v1978, %v1978
    %v2111 = vpack.c.bf16 %v1980, %v1980
    %v2112 = vpack.c.bf16 %v1983, %v1983
    %v2113 = vpack.c.bf16 %v1985, %v1985
    %v2114 = vpack.c.bf16 %v1988, %v1988
    %v2115 = vpack.c.bf16 %v1990, %v1990
    %v2116 = vpack.c.bf16 %v1993, %v1993
    %v2117 = vpack.c.bf16 %v1995, %v1995
    %v2118 = vpack.c.bf16 %v1998, %v1998
    %v2119 = vpack.c.bf16 %v2000, %v2000
    %v2120 = vpack.c.bf16 %v2003, %v2003
    %v2121 = vpack.c.bf16 %v2005, %v2005
    %v2122 = vpack.c.bf16 %v2008, %v2008
    %v2123 = vpack.c.bf16 %v2010, %v2010
    %v2124 = vpack.c.bf16 %v2013, %v2013
    %v2125 = vpack.c.bf16 %v2015, %v2015
    %v2126 = vpack.c.bf16 %v2018, %v2018
    %v2127 = vpack.c.bf16 %v2020, %v2020
    %v2128 = vpack.c.bf16 %v2023, %v2023
    %v2129 = vpack.c.bf16 %v2025, %v2025
    %v2130 = vpack.c.bf16 %v2028, %v2028
    %v2131 = vpack.c.bf16 %v2030, %v2030
    %v2132 = vpack.c.bf16 %v2033, %v2033
    %v2133 = vpack.c.bf16 %v2035, %v2035
    %v2134 = vpack.c.bf16 %v2038, %v2038
    %v2135 = vpack.c.bf16 %v2040, %v2040
    %v2136 = vpack.c.bf16 %v2043, %v2043
    %v2137 = vpack.c.bf16 %v2045, %v2045
    %v2138 = vpack.c.bf16 %v2048, %v2048
    %v2139 = vpack.c.bf16 %v2050, %v2050
    %v2140 = vpack.c.bf16 %v2053, %v2053
    %v2141 = vpack.c.bf16 %v2055, %v2055
    %v2142 = vpack.c.bf16 %v2058, %v2058
    %v2143 = vpack.c.bf16 %v2060, %v2060
    %v2144 = vpack.c.bf16 %v2063, %v2063
    %v2145 = vpack.c.bf16 %v2065, %v2065
    %v2146 = vpack.c.bf16 %v2068, %v2068
    %v2147 = vpack.c.bf16 %v2070, %v2070
    %v2148 = vpack.c.bf16 %v2073, %v2073
    %v2149 = vpack.c.bf16 %v2075, %v2075
    %v2150 = vpack.c.bf16 %v2078, %v2078
    %v2151 = vpack.c.bf16 %v2080, %v2080
    %v2152 = vpack.c.bf16 %v2083, %v2083
    %v2153 = vpack.c.bf16 %v2085, %v2085
    %v2154 = vpack.c.bf16 %v2088, %v2088
    %v2155 = vpack.c.bf16 %v2090, %v2090
    %2156 = vst [vmem:[#allocation2] sm:$0xf] %v2092
    %2157 = vst [vmem:[#allocation2 + $0x4] sm:$0xf] %v2093
    %2158 = vst [vmem:[#allocation2 + $0x8] sm:$0xf] %v2094
    %2159 = vst [vmem:[#allocation2 + $0xc] sm:$0xf] %v2095
    %2160 = vst [vmem:[#allocation2 + $0x10] sm:$0xf] %v2096
    %2161 = vst [vmem:[#allocation2 + $0x14] sm:$0xf] %v2097
    %2162 = vst [vmem:[#allocation2 + $0x18] sm:$0xf] %v2098
    %2163 = vst [vmem:[#allocation2 + $0x1c] sm:$0xf] %v2099
    %2164 = vst [vmem:[#allocation2 + $0x20] sm:$0xf] %v2100
    %2165 = vst [vmem:[#allocation2 + $0x24] sm:$0xf] %v2101
    %2166 = vst [vmem:[#allocation2 + $0x28] sm:$0xf] %v2102
    %2167 = vst [vmem:[#allocation2 + $0x2c] sm:$0xf] %v2103
    %2168 = vst [vmem:[#allocation2 + $0x30] sm:$0xf] %v2104
    %2169 = vst [vmem:[#allocation2 + $0x34] sm:$0xf] %v2105
    %2170 = vst [vmem:[#allocation2 + $0x38] sm:$0xf] %v2106
    %2171 = vst [vmem:[#allocation2 + $0x3c] sm:$0xf] %v2107
    %2172 = vst [vmem:[#allocation2 + $0x40] sm:$0xf] %v2108
    %2173 = vst [vmem:[#allocation2 + $0x44] sm:$0xf] %v2109
    %2174 = vst [vmem:[#allocation2 + $0x48] sm:$0xf] %v2110
    %2175 = vst [vmem:[#allocation2 + $0x4c] sm:$0xf] %v2111
    %2176 = vst [vmem:[#allocation2 + $0x50] sm:$0xf] %v2112
    %2177 = vst [vmem:[#allocation2 + $0x54] sm:$0xf] %v2113
    %2178 = vst [vmem:[#allocation2 + $0x58] sm:$0xf] %v2114
    %2179 = vst [vmem:[#allocation2 + $0x5c] sm:$0xf] %v2115
    %2180 = vst [vmem:[#allocation2 + $0x60] sm:$0xf] %v2116
    %2181 = vst [vmem:[#allocation2 + $0x64] sm:$0xf] %v2117
    %2182 = vst [vmem:[#allocation2 + $0x68] sm:$0xf] %v2118
    %2183 = vst [vmem:[#allocation2 + $0x6c] sm:$0xf] %v2119
    %2184 = vst [vmem:[#allocation2 + $0x70] sm:$0xf] %v2120
    %2185 = vst [vmem:[#allocation2 + $0x74] sm:$0xf] %v2121
    %2186 = vst [vmem:[#allocation2 + $0x78] sm:$0xf] %v2122
    %2187 = vst [vmem:[#allocation2 + $0x7c] sm:$0xf] %v2123
    %2188 = vst [vmem:[#allocation2 + $0x80] sm:$0xf] %v2124
    %2189 = vst [vmem:[#allocation2 + $0x84] sm:$0xf] %v2125
    %2190 = vst [vmem:[#allocation2 + $0x88] sm:$0xf] %v2126
    %2191 = vst [vmem:[#allocation2 + $0x8c] sm:$0xf] %v2127
    %2192 = vst [vmem:[#allocation2 + $0x90] sm:$0xf] %v2128
    %2193 = vst [vmem:[#allocation2 + $0x94] sm:$0xf] %v2129
    %2194 = vst [vmem:[#allocation2 + $0x98] sm:$0xf] %v2130
    %2195 = vst [vmem:[#allocation2 + $0x9c] sm:$0xf] %v2131
    %2196 = vst [vmem:[#allocation2 + $0xa0] sm:$0xf] %v2132
    %2197 = vst [vmem:[#allocation2 + $0xa4] sm:$0xf] %v2133
    %2198 = vst [vmem:[#allocation2 + $0xa8] sm:$0xf] %v2134
    %2199 = vst [vmem:[#allocation2 + $0xac] sm:$0xf] %v2135
    %2200 = vst [vmem:[#allocation2 + $0xb0] sm:$0xf] %v2136
    %2201 = vst [vmem:[#allocation2 + $0xb4] sm:$0xf] %v2137
    %2202 = vst [vmem:[#allocation2 + $0xb8] sm:$0xf] %v2138
    %2203 = vst [vmem:[#allocation2 + $0xbc] sm:$0xf] %v2139
    %2204 = vst [vmem:[#allocation2 + $0xc0] sm:$0xf] %v2140
    %2205 = vst [vmem:[#allocation2 + $0xc4] sm:$0xf] %v2141
    %2206 = vst [vmem:[#allocation2 + $0xc8] sm:$0xf] %v2142
    %2207 = vst [vmem:[#allocation2 + $0xcc] sm:$0xf] %v2143
    %2208 = vst [vmem:[#allocation2 + $0xd0] sm:$0xf] %v2144
    %2209 = vst [vmem:[#allocation2 + $0xd4] sm:$0xf] %v2145
    %2210 = vst [vmem:[#allocation2 + $0xd8] sm:$0xf] %v2146
    %2211 = vst [vmem:[#allocation2 + $0xdc] sm:$0xf] %v2147
    %2212 = vst [vmem:[#allocation2 + $0xe0] sm:$0xf] %v2148
    %2213 = vst [vmem:[#allocation2 + $0xe4] sm:$0xf] %v2149
    %2214 = vst [vmem:[#allocation2 + $0xe8] sm:$0xf] %v2150
    %2215 = vst [vmem:[#allocation2 + $0xec] sm:$0xf] %v2151
    %2216 = vst [vmem:[#allocation2 + $0xf0] sm:$0xf] %v2152
    %2217 = vst [vmem:[#allocation2 + $0xf4] sm:$0xf] %v2153
    %2218 = vst [vmem:[#allocation2 + $0xf8] sm:$0xf] %v2154
    %2219 = vst [vmem:[#allocation2 + $0xfc] sm:$0xf] %v2155
    // Predicated region
    $region22: #{tpu_custom_call.1} parent=1 // pred_check
      _
    $region23: #{tpu_custom_call.1} parent=1 // pred_check_branch
      %2221 = sbr.rel (0) target = $region25
    $region24: #{tpu_custom_call.1} parent=1 // pred_region
      %2223 = vsyncadd [#allocation3], 0
      %s2224 = sshll.u32 [#allocation2], 4
      %s2225 = int_to_ptr.vmem [resolvable:$true] %s2224
      %s2226 = sshll.u32 %s5, 4
      %s2227 = int_to_ptr.hbm [resolvable:$true] %s2226
      %2232 = dma.vmem_to_hbm [thread:$0]  %s2225, 4096, %s2227, [#allocation3], 64, 64, 4
    $region25: #{tpu_custom_call.1} parent=1 // pred_fallthru
      _
    // Predicated region
    $region26: #{tpu_custom_call.1} parent=1 // pred_check
      _
    $region27: #{tpu_custom_call.1} parent=1 // pred_check_branch
      %2234 = sbr.rel (0) target = $region29
    $region28: #{tpu_custom_call.1} parent=1 // pred_region
      %2236 = dma.done [#allocation3], 4096
    $region29: #{tpu_custom_call.1} parent=1 // pred_fallthru
      _
    %2237 = vsyncpa [#allocation3], 1

</llo_original>
